<compile_context>
chip_gen: v5e
topology: v5e:2x2
jax: 0.10.0
libtpu: 0.0.40
codegen_flags: <defaults>
</compile_context>

<pallas_src>
import functools

import jax
import jax.numpy as jnp
from jax.experimental import pallas as pl
from jax.experimental.pallas import tpu as pltpu

LANE = 128
SUBLANE = 8


def _round_up(n, m):
    return ((n + m - 1) // m) * m


# --------------------------- Pallas kernel ----------------------------------

def lstm_fused_kernel(x_ref, wih_ref, b_ref, whh_ref, wo_ref, bo_ref,
                      out_ref, pre_ref, h_ref, c_ref, *, tc, t_total, bp, hp):
    """One grid step == one chunk of `tc` timesteps.

    x_ref   : (tc*bp, I)   bf16   chunk of inputs (time-major, batch-padded)
    wih_ref : (I, 4*hp)    bf16   W_ih^T (gate blocks padded to hp)
    b_ref   : (1, 4*hp)    f32    b_ih + b_hh
    whh_ref : (hp, 4*hp)   bf16   W_hh^T
    wo_ref  : (hp, Op)     bf16   merged [actor; critic] head weights^T
    bo_ref  : (1, Op)      f32    merged head bias
    out_ref : (bp, Op)     f32    final policy|value slab (written at last step)
    pre_ref : (tc*bp, 4*hp) f32   VMEM scratch: chunk pre-gates
    h_ref/c_ref : (bp, hp) f32    persistent recurrent state
    """
    c_idx = pl.program_id(0)

    @pl.when(c_idx == 0)
    def _init():
        h_ref[...] = jnp.zeros_like(h_ref)
        c_ref[...] = jnp.zeros_like(c_ref)

    # Input projection for the whole chunk: one bf16 MXU matmul, f32 accumulate.
    pre_ref[...] = (jnp.dot(x_ref[...], wih_ref[...],
                            preferred_element_type=jnp.float32)
                    + b_ref[...])

    whh = whh_ref[...]  # bf16, resident for the whole chunk

    def step(t, carry):
        t_global = c_idx * tc + t
        row = pl.multiple_of(t * bp, bp)
        pg = pre_ref[pl.ds(row, bp), :]                      # (bp, 4hp) f32

        # Recurrent path: bf16 operands, f32 accumulation.
        gates = pg + jnp.dot(h_ref[...].astype(jnp.bfloat16), whh,
                             preferred_element_type=jnp.float32)

        # hp == 128 -> every gate slice is a full lane-aligned (bp, 128) slab.
        i_g = jax.nn.sigmoid(gates[:, 0 * hp:1 * hp])
        f_g = jax.nn.sigmoid(gates[:, 1 * hp:2 * hp])
        g_g = jnp.tanh(gates[:, 2 * hp:3 * hp])
        o_g = jax.nn.sigmoid(gates[:, 3 * hp:4 * hp])

        c_new = f_g * c_ref[...] + i_g * g_g
        h_new = o_g * jnp.tanh(c_new)

        # Guard against padded trailing timesteps in the last chunk.
        valid = t_global < t_total
        c_ref[...] = jnp.where(valid, c_new, c_ref[...])
        h_ref[...] = jnp.where(valid, h_new, h_ref[...])
        return carry

    jax.lax.fori_loop(0, tc, step, 0, unroll=True)

    @pl.when(c_idx == pl.num_programs(0) - 1)
    def _heads():
        # Merged actor+critic head: single lane-dense (bp, Op) store.
        out_ref[...] = (jnp.dot(h_ref[...].astype(jnp.bfloat16), wo_ref[...],
                                preferred_element_type=jnp.float32)
                        + bo_ref[...])


# ------------------------------ Wrapper --------------------------------------

def actor_critic_lstm(x, params, *, time_chunk=8):
    """x: (B, T, input_size) float32, batch_first like the PyTorch module."""
    B, T, I = x.shape
    H = params["w_hh"].shape[1]          # w_hh: (4H, H)
    A = params["w_actor"].shape[0]

    Hp = _round_up(max(H, LANE), LANE)   # lane-aligned hidden size
    Bp = _round_up(max(B, SUBLANE), SUBLANE)
    Op = _round_up(A + 1, LANE)          # merged actor+critic output width

    TC = min(time_chunk, T)              # timesteps unrolled per grid step
    n_chunks = pl.cdiv(T, TC)
    Tp = n_chunks * TC

    f32, bf16 = jnp.float32, jnp.bfloat16

    def pad_gate_rows(w):
        # (4H, ...) -> (4Hp, ...): pad each of the 4 PyTorch gate blocks to Hp.
        w4 = w.reshape(4, H, *w.shape[1:])
        pad = [(0, 0), (0, Hp - H)] + [(0, 0)] * (w4.ndim - 2)
        return jnp.pad(w4, pad).reshape(4 * Hp, *w.shape[1:])

    w_ih_p = pad_gate_rows(params["w_ih"].astype(f32))                 # (4Hp, I)
    w_hh_p = pad_gate_rows(params["w_hh"].astype(f32))                 # (4Hp, H)
    w_hh_p = jnp.pad(w_hh_p, ((0, 0), (0, Hp - H)))                    # (4Hp, Hp)
    b_p = pad_gate_rows((params["b_ih"] + params["b_hh"]).astype(f32)) # (4Hp,)

    wih_t = w_ih_p.T.astype(bf16)                   # (I, 4Hp)  bf16
    whh_t = w_hh_p.T.astype(bf16)                   # (Hp, 4Hp) bf16
    b = b_p.reshape(1, 4 * Hp)                      # f32

    # Merged actor + critic head, zero-padded to a lane-dense slab.
    w_heads = jnp.concatenate(
        [params["w_actor"], params["w_critic"]], axis=0).astype(f32)   # (A+1, H)
    w_heads = jnp.pad(w_heads, ((0, Op - (A + 1)), (0, Hp - H)))       # (Op, Hp)
    wo = w_heads.T.astype(bf16)                                        # (Hp, Op)
    b_heads = jnp.concatenate(
        [params["b_actor"], params["b_critic"]], axis=0).astype(f32)   # (A+1,)
    bo = jnp.pad(b_heads, (0, Op - (A + 1))).reshape(1, Op)

    # Time-major input, batch padded to a sublane multiple, time padded to a
    # whole number of chunks (padded steps are masked in-kernel).
    x_tm = jnp.transpose(x, (1, 0, 2)).astype(bf16)                    # (T, B, I)
    x_tm = jnp.pad(x_tm, ((0, Tp - T), (0, Bp - B), (0, 0)))           # (Tp, Bp, I)
    x2d = x_tm.reshape(Tp * Bp, I)                                     # (Tp*Bp, I)

    kernel = functools.partial(lstm_fused_kernel, tc=TC, t_total=T, bp=Bp, hp=Hp)

    out = pl.pallas_call(
        kernel,
        out_shape=jax.ShapeDtypeStruct((Bp, Op), f32),
        grid_spec=pltpu.PrefetchScalarGridSpec(
            num_scalar_prefetch=0,
            grid=(n_chunks,),
            in_specs=[
                pl.BlockSpec((TC * Bp, I), lambda c: (c, 0)),      # x chunk (streamed)
                pl.BlockSpec((I, 4 * Hp), lambda c: (0, 0)),       # W_ih^T (resident)
                pl.BlockSpec((1, 4 * Hp), lambda c: (0, 0)),       # lstm bias
                pl.BlockSpec((Hp, 4 * Hp), lambda c: (0, 0)),      # W_hh^T (resident)
                pl.BlockSpec((Hp, Op), lambda c: (0, 0)),          # merged head W
                pl.BlockSpec((1, Op), lambda c: (0, 0)),           # merged head bias
            ],
            out_specs=pl.BlockSpec((Bp, Op), lambda c: (0, 0)),
            scratch_shapes=[
                pltpu.VMEM((TC * Bp, 4 * Hp), f32),                # chunk pre-gates
                pltpu.VMEM((Bp, Hp), f32),                         # h
                pltpu.VMEM((Bp, Hp), f32),                         # c
            ],
        ),
        compiler_params=pltpu.CompilerParams(
            dimension_semantics=("arbitrary",)),                   # sequential in time
    )(x2d, wih_t, b, whh_t, wo, bo)

    policy = out[:B, :A]
    value = out[:B, A:A + 1]
    return policy, value


# --------------------------- Pure-JAX reference -------------------------------

def reference_forward(x, params):
    """Matches torch.nn.LSTM (batch_first) + Linear heads semantics (f32)."""
    B, T, I = x.shape
    H = params["w_hh"].shape[1]
    h = jnp.zeros((B, H), jnp.float32)
    c = jnp.zeros((B, H), jnp.float32)
    bias = params["b_ih"] + params["b_hh"]
    for t in range(T):
        gates = x[:, t, :] @ params["w_ih"].T + h @ params["w_hh"].T + bias
        i_g = jax.nn.sigmoid(gates[:, 0 * H:1 * H])
        f_g = jax.nn.sigmoid(gates[:, 1 * H:2 * H])
        g_g = jnp.tanh(gates[:, 2 * H:3 * H])
        o_g = jax.nn.sigmoid(gates[:, 3 * H:4 * H])
        c = f_g * c + i_g * g_g
        h = o_g * jnp.tanh(c)
    policy = h @ params["w_actor"].T + params["b_actor"]
    value = h @ params["w_critic"].T + params["b_critic"]
    return policy, value


def init_params(key, input_size, hidden_size, num_actions):
    ks = jax.random.split(key, 8)
    s = 1.0 / jnp.sqrt(hidden_size)
    u = lambda k, shape: jax.random.uniform(k, shape, jnp.float32, -s, s)
    return {
        "w_ih": u(ks[0], (4 * hidden_size, input_size)),
        "w_hh": u(ks[1], (4 * hidden_size, hidden_size)),
        "b_ih": u(ks[2], (4 * hidden_size,)),
        "b_hh": u(ks[3], (4 * hidden_size,)),
        "w_actor": u(ks[4], (num_actions, hidden_size)),
        "b_actor": u(ks[5], (num_actions,)),
        "w_critic": u(ks[6], (1, hidden_size)),
        "b_critic": u(ks[7], (1,)),
    }


if __name__ == "__main__":
    B, T, INPUT, HIDDEN, ACTIONS = 2, 8, 16, 32, 4

    key = jax.random.PRNGKey(0)
    k_x, k_p = jax.random.split(key)
    x = jax.random.normal(k_x, (B, T, INPUT), jnp.float32)
    params = init_params(k_p, INPUT, HIDDEN, ACTIONS)

    policy, value = actor_critic_lstm(x, params)
    policy = jax.block_until_ready(policy)
    value = jax.block_until_ready(value)

    ref_policy, ref_value = reference_forward(x, params)
    assert policy.shape == (B, ACTIONS) and value.shape == (B, 1)
    # Matmul operands are bf16 (f32 accumulation), so tolerance is looser than
    # the pure-f32 variant.
    assert jnp.allclose(policy, ref_policy, atol=3e-2, rtol=3e-2)
    assert jnp.allclose(value, ref_value, atol=3e-2, rtol=3e-2)

    print("KERNEL_OK")
</pallas_src>

<mosaic_0001>
module attributes {stable_mosaic.version = 11 : i64} {
  func.func @lstm_fused_kernel(%arg0: i32, %arg1: memref<64x16xbf16, #tpu.memory_space<vmem>>, %arg2: memref<16x512xbf16, #tpu.memory_space<vmem>>, %arg3: memref<1x512xf32, #tpu.memory_space<vmem>>, %arg4: memref<128x512xbf16, #tpu.memory_space<vmem>>, %arg5: memref<128x128xbf16, #tpu.memory_space<vmem>>, %arg6: memref<1x128xf32, #tpu.memory_space<vmem>>, %arg7: memref<8x128xf32, #tpu.memory_space<vmem>>, %arg8: memref<64x512xf32, #tpu.memory_space<vmem>>, %arg9: memref<8x128xf32, #tpu.memory_space<vmem>>, %arg10: memref<8x128xf32, #tpu.memory_space<vmem>>) attributes {dimension_semantics = [#tpu.dimension_semantics<arbitrary>], iteration_bounds = array<i64: 1>, scalar_prefetch = 0 : i64, scratch_operands = 3 : i64, tpu.core_type = #tpu.core_type<tc>, window_params = [{transform_indices = @transform_0, window_bounds = array<i64: 64, 16>}, {pipeline_mode = #tpu.pipeline_mode<synchronous>, transform_indices = @transform_1, window_bounds = array<i64: 16, 512>}, {pipeline_mode = #tpu.pipeline_mode<synchronous>, transform_indices = @transform_2, window_bounds = array<i64: 1, 512>}, {pipeline_mode = #tpu.pipeline_mode<synchronous>, transform_indices = @transform_3, window_bounds = array<i64: 128, 512>}, {pipeline_mode = #tpu.pipeline_mode<synchronous>, transform_indices = @transform_4, window_bounds = array<i64: 128, 128>}, {pipeline_mode = #tpu.pipeline_mode<synchronous>, transform_indices = @transform_5, window_bounds = array<i64: 1, 128>}, {pipeline_mode = #tpu.pipeline_mode<synchronous>, transform_indices = @transform_6, window_bounds = array<i64: 8, 128>}]} {
    %c0_i32 = arith.constant 0 : i32
    %0 = arith.cmpi eq, %arg0, %c0_i32 : i32
    %1 = arith.extui %0 : i1 to i32
    %c0_i32_0 = arith.constant 0 : i32
    %2 = arith.cmpi ne, %1, %c0_i32_0 : i32
    scf.if %2 {
      %cst_173 = arith.constant 0.000000e+00 : f32
      %358 = vector.broadcast %cst_173 : f32 to vector<8x128xf32>
      %c0_174 = arith.constant 0 : index
      %c0_175 = arith.constant 0 : index
      %359 = vector.load %arg9[%c0_174, %c0_175] : memref<8x128xf32, #tpu.memory_space<vmem>>, vector<8x128xf32>
      tpu.vector_store %arg9[%c0_174, %c0_175], %358 {strides = array<i32>} : memref<8x128xf32, #tpu.memory_space<vmem>>, vector<8x128xf32>,
      %cst_176 = arith.constant 0.000000e+00 : f32
      %360 = vector.broadcast %cst_176 : f32 to vector<8x128xf32>
      %c0_177 = arith.constant 0 : index
      %c0_178 = arith.constant 0 : index
      %361 = vector.load %arg10[%c0_177, %c0_178] : memref<8x128xf32, #tpu.memory_space<vmem>>, vector<8x128xf32>
      tpu.vector_store %arg10[%c0_177, %c0_178], %360 {strides = array<i32>} : memref<8x128xf32, #tpu.memory_space<vmem>>, vector<8x128xf32>,
    } else {
    }
    %c0 = arith.constant 0 : index
    %c0_1 = arith.constant 0 : index
    %3 = vector.load %arg1[%c0, %c0_1] : memref<64x16xbf16, #tpu.memory_space<vmem>>, vector<64x16xbf16>
    %c0_2 = arith.constant 0 : index
    %c0_3 = arith.constant 0 : index
    %4 = vector.load %arg2[%c0_2, %c0_3] : memref<16x512xbf16, #tpu.memory_space<vmem>>, vector<16x512xbf16>
    %cst = arith.constant dense<0.000000e+00> : vector<64x512xf32>
    %5 = tpu.matmul %3, %4, %cst {dimension_numbers = #tpu.dot_dimension_numbers<[1], [0], [0], [1], [0, 0, 1, 1], [], []>} : vector<64x16xbf16>, vector<16x512xbf16>, vector<64x512xf32> -> vector<64x512xf32>
    %c0_4 = arith.constant 0 : index
    %c0_5 = arith.constant 0 : index
    %6 = vector.load %arg3[%c0_4, %c0_5] : memref<1x512xf32, #tpu.memory_space<vmem>>, vector<1x512xf32>
    %7 = vector.broadcast %6 : vector<1x512xf32> to vector<64x512xf32>
    %8 = arith.addf %5, %7 : vector<64x512xf32>
    %c0_6 = arith.constant 0 : index
    %c0_7 = arith.constant 0 : index
    %9 = vector.load %arg8[%c0_6, %c0_7] : memref<64x512xf32, #tpu.memory_space<vmem>>, vector<64x512xf32>
    tpu.vector_store %arg8[%c0_6, %c0_7], %8 {strides = array<i32>} : memref<64x512xf32, #tpu.memory_space<vmem>>, vector<64x512xf32>,
    %c0_8 = arith.constant 0 : index
    %c0_9 = arith.constant 0 : index
    %10 = vector.load %arg4[%c0_8, %c0_9] : memref<128x512xbf16, #tpu.memory_space<vmem>>, vector<128x512xbf16>
    %c0_i32_10 = arith.constant 0 : i32
    %c8_i32 = arith.constant 8 : i32
    %11 = arith.muli %arg0, %c8_i32 : i32
    %12 = arith.addi %11, %c0_i32_10 : i32
    %c8_i32_11 = arith.constant 8 : i32
    %13 = arith.muli %c0_i32_10, %c8_i32_11 : i32
    %14 = tpu.assume_multiple %13, 8 : i32
    %15 = arith.index_cast %14 : i32 to index
    %c0_12 = arith.constant 0 : index
    %16 = vector.load %arg8[%15, %c0_12] : memref<64x512xf32, #tpu.memory_space<vmem>>, vector<8x512xf32>
    %c0_13 = arith.constant 0 : index
    %c0_14 = arith.constant 0 : index
    %17 = vector.load %arg9[%c0_13, %c0_14] : memref<8x128xf32, #tpu.memory_space<vmem>>, vector<8x128xf32>
    %18 = arith.truncf %17 : vector<8x128xf32> to vector<8x128xbf16>
    %cst_15 = arith.constant dense<0.000000e+00> : vector<8x512xf32>
    %19 = tpu.matmul %18, %10, %cst_15 {dimension_numbers = #tpu.dot_dimension_numbers<[1], [0], [0], [1], [0, 0, 1, 1], [], []>} : vector<8x128xbf16>, vector<128x512xbf16>, vector<8x512xf32> -> vector<8x512xf32>
    %20 = arith.addf %16, %19 : vector<8x512xf32>
    %21 = vector.extract_strided_slice %20 {offsets = [0, 0], sizes = [8, 128], strides = [1, 1]} : vector<8x512xf32> to vector<8x128xf32>
    %22 = arith.negf %21 : vector<8x128xf32>
    %23 = math.exp %22 : vector<8x128xf32>
    %cst_16 = arith.constant 1.000000e+00 : f32
    %24 = vector.broadcast %cst_16 : f32 to vector<8x128xf32>
    %25 = arith.addf %24, %23 : vector<8x128xf32>
    %26 = arith.divf %24, %25 : vector<8x128xf32>
    %27 = vector.extract_strided_slice %20 {offsets = [0, 128], sizes = [8, 128], strides = [1, 1]} : vector<8x512xf32> to vector<8x128xf32>
    %28 = arith.negf %27 : vector<8x128xf32>
    %29 = math.exp %28 : vector<8x128xf32>
    %cst_17 = arith.constant 1.000000e+00 : f32
    %30 = vector.broadcast %cst_17 : f32 to vector<8x128xf32>
    %31 = arith.addf %30, %29 : vector<8x128xf32>
    %32 = arith.divf %30, %31 : vector<8x128xf32>
    %33 = vector.extract_strided_slice %20 {offsets = [0, 256], sizes = [8, 128], strides = [1, 1]} : vector<8x512xf32> to vector<8x128xf32>
    %34 = math.tanh %33 : vector<8x128xf32>
    %35 = vector.extract_strided_slice %20 {offsets = [0, 384], sizes = [8, 128], strides = [1, 1]} : vector<8x512xf32> to vector<8x128xf32>
    %36 = arith.negf %35 : vector<8x128xf32>
    %37 = math.exp %36 : vector<8x128xf32>
    %cst_18 = arith.constant 1.000000e+00 : f32
    %38 = vector.broadcast %cst_18 : f32 to vector<8x128xf32>
    %39 = arith.addf %38, %37 : vector<8x128xf32>
    %40 = arith.divf %38, %39 : vector<8x128xf32>
    %c0_19 = arith.constant 0 : index
    %c0_20 = arith.constant 0 : index
    %41 = vector.load %arg10[%c0_19, %c0_20] : memref<8x128xf32, #tpu.memory_space<vmem>>, vector<8x128xf32>
    %42 = arith.mulf %32, %41 : vector<8x128xf32>
    %43 = arith.mulf %26, %34 : vector<8x128xf32>
    %44 = arith.addf %42, %43 : vector<8x128xf32>
    %45 = math.tanh %44 : vector<8x128xf32>
    %46 = arith.mulf %40, %45 : vector<8x128xf32>
    %c8_i32_21 = arith.constant 8 : i32
    %47 = arith.cmpi slt, %12, %c8_i32_21 : i32
    %c0_22 = arith.constant 0 : index
    %c0_23 = arith.constant 0 : index
    %48 = vector.load %arg10[%c0_22, %c0_23] : memref<8x128xf32, #tpu.memory_space<vmem>>, vector<8x128xf32>
    %49 = arith.select %47, %44, %48 : vector<8x128xf32>
    %c0_24 = arith.constant 0 : index
    %c0_25 = arith.constant 0 : index
    %50 = vector.load %arg10[%c0_24, %c0_25] : memref<8x128xf32, #tpu.memory_space<vmem>>, vector<8x128xf32>
    tpu.vector_store %arg10[%c0_24, %c0_25], %49 {strides = array<i32>} : memref<8x128xf32, #tpu.memory_space<vmem>>, vector<8x128xf32>,
    %c0_26 = arith.constant 0 : index
    %c0_27 = arith.constant 0 : index
    %51 = vector.load %arg9[%c0_26, %c0_27] : memref<8x128xf32, #tpu.memory_space<vmem>>, vector<8x128xf32>
    %52 = arith.select %47, %46, %51 : vector<8x128xf32>
    %c0_28 = arith.constant 0 : index
    %c0_29 = arith.constant 0 : index
    %53 = vector.load %arg9[%c0_28, %c0_29] : memref<8x128xf32, #tpu.memory_space<vmem>>, vector<8x128xf32>
    tpu.vector_store %arg9[%c0_28, %c0_29], %52 {strides = array<i32>} : memref<8x128xf32, #tpu.memory_space<vmem>>, vector<8x128xf32>,
    %c1_i32 = arith.constant 1 : i32
    %c8_i32_30 = arith.constant 8 : i32
    %54 = arith.muli %arg0, %c8_i32_30 : i32
    %55 = arith.addi %54, %c1_i32 : i32
    %c8_i32_31 = arith.constant 8 : i32
    %56 = arith.muli %c1_i32, %c8_i32_31 : i32
    %57 = tpu.assume_multiple %56, 8 : i32
    %58 = arith.index_cast %57 : i32 to index
    %c0_32 = arith.constant 0 : index
    %59 = vector.load %arg8[%58, %c0_32] : memref<64x512xf32, #tpu.memory_space<vmem>>, vector<8x512xf32>
    %c0_33 = arith.constant 0 : index
    %c0_34 = arith.constant 0 : index
    %60 = vector.load %arg9[%c0_33, %c0_34] : memref<8x128xf32, #tpu.memory_space<vmem>>, vector<8x128xf32>
    %61 = arith.truncf %60 : vector<8x128xf32> to vector<8x128xbf16>
    %cst_35 = arith.constant dense<0.000000e+00> : vector<8x512xf32>
    %62 = tpu.matmul %61, %10, %cst_35 {dimension_numbers = #tpu.dot_dimension_numbers<[1], [0], [0], [1], [0, 0, 1, 1], [], []>} : vector<8x128xbf16>, vector<128x512xbf16>, vector<8x512xf32> -> vector<8x512xf32>
    %63 = arith.addf %59, %62 : vector<8x512xf32>
    %64 = vector.extract_strided_slice %63 {offsets = [0, 0], sizes = [8, 128], strides = [1, 1]} : vector<8x512xf32> to vector<8x128xf32>
    %65 = arith.negf %64 : vector<8x128xf32>
    %66 = math.exp %65 : vector<8x128xf32>
    %cst_36 = arith.constant 1.000000e+00 : f32
    %67 = vector.broadcast %cst_36 : f32 to vector<8x128xf32>
    %68 = arith.addf %67, %66 : vector<8x128xf32>
    %69 = arith.divf %67, %68 : vector<8x128xf32>
    %70 = vector.extract_strided_slice %63 {offsets = [0, 128], sizes = [8, 128], strides = [1, 1]} : vector<8x512xf32> to vector<8x128xf32>
    %71 = arith.negf %70 : vector<8x128xf32>
    %72 = math.exp %71 : vector<8x128xf32>
    %cst_37 = arith.constant 1.000000e+00 : f32
    %73 = vector.broadcast %cst_37 : f32 to vector<8x128xf32>
    %74 = arith.addf %73, %72 : vector<8x128xf32>
    %75 = arith.divf %73, %74 : vector<8x128xf32>
    %76 = vector.extract_strided_slice %63 {offsets = [0, 256], sizes = [8, 128], strides = [1, 1]} : vector<8x512xf32> to vector<8x128xf32>
    %77 = math.tanh %76 : vector<8x128xf32>
    %78 = vector.extract_strided_slice %63 {offsets = [0, 384], sizes = [8, 128], strides = [1, 1]} : vector<8x512xf32> to vector<8x128xf32>
    %79 = arith.negf %78 : vector<8x128xf32>
    %80 = math.exp %79 : vector<8x128xf32>
    %cst_38 = arith.constant 1.000000e+00 : f32
    %81 = vector.broadcast %cst_38 : f32 to vector<8x128xf32>
    %82 = arith.addf %81, %80 : vector<8x128xf32>
    %83 = arith.divf %81, %82 : vector<8x128xf32>
    %c0_39 = arith.constant 0 : index
    %c0_40 = arith.constant 0 : index
    %84 = vector.load %arg10[%c0_39, %c0_40] : memref<8x128xf32, #tpu.memory_space<vmem>>, vector<8x128xf32>
    %85 = arith.mulf %75, %84 : vector<8x128xf32>
    %86 = arith.mulf %69, %77 : vector<8x128xf32>
    %87 = arith.addf %85, %86 : vector<8x128xf32>
    %88 = math.tanh %87 : vector<8x128xf32>
    %89 = arith.mulf %83, %88 : vector<8x128xf32>
    %c8_i32_41 = arith.constant 8 : i32
    %90 = arith.cmpi slt, %55, %c8_i32_41 : i32
    %c0_42 = arith.constant 0 : index
    %c0_43 = arith.constant 0 : index
    %91 = vector.load %arg10[%c0_42, %c0_43] : memref<8x128xf32, #tpu.memory_space<vmem>>, vector<8x128xf32>
    %92 = arith.select %90, %87, %91 : vector<8x128xf32>
    %c0_44 = arith.constant 0 : index
    %c0_45 = arith.constant 0 : index
    %93 = vector.load %arg10[%c0_44, %c0_45] : memref<8x128xf32, #tpu.memory_space<vmem>>, vector<8x128xf32>
    tpu.vector_store %arg10[%c0_44, %c0_45], %92 {strides = array<i32>} : memref<8x128xf32, #tpu.memory_space<vmem>>, vector<8x128xf32>,
    %c0_46 = arith.constant 0 : index
    %c0_47 = arith.constant 0 : index
    %94 = vector.load %arg9[%c0_46, %c0_47] : memref<8x128xf32, #tpu.memory_space<vmem>>, vector<8x128xf32>
    %95 = arith.select %90, %89, %94 : vector<8x128xf32>
    %c0_48 = arith.constant 0 : index
    %c0_49 = arith.constant 0 : index
    %96 = vector.load %arg9[%c0_48, %c0_49] : memref<8x128xf32, #tpu.memory_space<vmem>>, vector<8x128xf32>
    tpu.vector_store %arg9[%c0_48, %c0_49], %95 {strides = array<i32>} : memref<8x128xf32, #tpu.memory_space<vmem>>, vector<8x128xf32>,
    %c2_i32 = arith.constant 2 : i32
    %c8_i32_50 = arith.constant 8 : i32
    %97 = arith.muli %arg0, %c8_i32_50 : i32
    %98 = arith.addi %97, %c2_i32 : i32
    %c8_i32_51 = arith.constant 8 : i32
    %99 = arith.muli %c2_i32, %c8_i32_51 : i32
    %100 = tpu.assume_multiple %99, 8 : i32
    %101 = arith.index_cast %100 : i32 to index
    %c0_52 = arith.constant 0 : index
    %102 = vector.load %arg8[%101, %c0_52] : memref<64x512xf32, #tpu.memory_space<vmem>>, vector<8x512xf32>
    %c0_53 = arith.constant 0 : index
    %c0_54 = arith.constant 0 : index
    %103 = vector.load %arg9[%c0_53, %c0_54] : memref<8x128xf32, #tpu.memory_space<vmem>>, vector<8x128xf32>
    %104 = arith.truncf %103 : vector<8x128xf32> to vector<8x128xbf16>
    %cst_55 = arith.constant dense<0.000000e+00> : vector<8x512xf32>
    %105 = tpu.matmul %104, %10, %cst_55 {dimension_numbers = #tpu.dot_dimension_numbers<[1], [0], [0], [1], [0, 0, 1, 1], [], []>} : vector<8x128xbf16>, vector<128x512xbf16>, vector<8x512xf32> -> vector<8x512xf32>
    %106 = arith.addf %102, %105 : vector<8x512xf32>
    %107 = vector.extract_strided_slice %106 {offsets = [0, 0], sizes = [8, 128], strides = [1, 1]} : vector<8x512xf32> to vector<8x128xf32>
    %108 = arith.negf %107 : vector<8x128xf32>
    %109 = math.exp %108 : vector<8x128xf32>
    %cst_56 = arith.constant 1.000000e+00 : f32
    %110 = vector.broadcast %cst_56 : f32 to vector<8x128xf32>
    %111 = arith.addf %110, %109 : vector<8x128xf32>
    %112 = arith.divf %110, %111 : vector<8x128xf32>
    %113 = vector.extract_strided_slice %106 {offsets = [0, 128], sizes = [8, 128], strides = [1, 1]} : vector<8x512xf32> to vector<8x128xf32>
    %114 = arith.negf %113 : vector<8x128xf32>
    %115 = math.exp %114 : vector<8x128xf32>
    %cst_57 = arith.constant 1.000000e+00 : f32
    %116 = vector.broadcast %cst_57 : f32 to vector<8x128xf32>
    %117 = arith.addf %116, %115 : vector<8x128xf32>
    %118 = arith.divf %116, %117 : vector<8x128xf32>
    %119 = vector.extract_strided_slice %106 {offsets = [0, 256], sizes = [8, 128], strides = [1, 1]} : vector<8x512xf32> to vector<8x128xf32>
    %120 = math.tanh %119 : vector<8x128xf32>
    %121 = vector.extract_strided_slice %106 {offsets = [0, 384], sizes = [8, 128], strides = [1, 1]} : vector<8x512xf32> to vector<8x128xf32>
    %122 = arith.negf %121 : vector<8x128xf32>
    %123 = math.exp %122 : vector<8x128xf32>
    %cst_58 = arith.constant 1.000000e+00 : f32
    %124 = vector.broadcast %cst_58 : f32 to vector<8x128xf32>
    %125 = arith.addf %124, %123 : vector<8x128xf32>
    %126 = arith.divf %124, %125 : vector<8x128xf32>
    %c0_59 = arith.constant 0 : index
    %c0_60 = arith.constant 0 : index
    %127 = vector.load %arg10[%c0_59, %c0_60] : memref<8x128xf32, #tpu.memory_space<vmem>>, vector<8x128xf32>
    %128 = arith.mulf %118, %127 : vector<8x128xf32>
    %129 = arith.mulf %112, %120 : vector<8x128xf32>
    %130 = arith.addf %128, %129 : vector<8x128xf32>
    %131 = math.tanh %130 : vector<8x128xf32>
    %132 = arith.mulf %126, %131 : vector<8x128xf32>
    %c8_i32_61 = arith.constant 8 : i32
    %133 = arith.cmpi slt, %98, %c8_i32_61 : i32
    %c0_62 = arith.constant 0 : index
    %c0_63 = arith.constant 0 : index
    %134 = vector.load %arg10[%c0_62, %c0_63] : memref<8x128xf32, #tpu.memory_space<vmem>>, vector<8x128xf32>
    %135 = arith.select %133, %130, %134 : vector<8x128xf32>
    %c0_64 = arith.constant 0 : index
    %c0_65 = arith.constant 0 : index
    %136 = vector.load %arg10[%c0_64, %c0_65] : memref<8x128xf32, #tpu.memory_space<vmem>>, vector<8x128xf32>
    tpu.vector_store %arg10[%c0_64, %c0_65], %135 {strides = array<i32>} : memref<8x128xf32, #tpu.memory_space<vmem>>, vector<8x128xf32>,
    %c0_66 = arith.constant 0 : index
    %c0_67 = arith.constant 0 : index
    %137 = vector.load %arg9[%c0_66, %c0_67] : memref<8x128xf32, #tpu.memory_space<vmem>>, vector<8x128xf32>
    %138 = arith.select %133, %132, %137 : vector<8x128xf32>
    %c0_68 = arith.constant 0 : index
    %c0_69 = arith.constant 0 : index
    %139 = vector.load %arg9[%c0_68, %c0_69] : memref<8x128xf32, #tpu.memory_space<vmem>>, vector<8x128xf32>
    tpu.vector_store %arg9[%c0_68, %c0_69], %138 {strides = array<i32>} : memref<8x128xf32, #tpu.memory_space<vmem>>, vector<8x128xf32>,
    %c3_i32 = arith.constant 3 : i32
    %c8_i32_70 = arith.constant 8 : i32
    %140 = arith.muli %arg0, %c8_i32_70 : i32
    %141 = arith.addi %140, %c3_i32 : i32
    %c8_i32_71 = arith.constant 8 : i32
    %142 = arith.muli %c3_i32, %c8_i32_71 : i32
    %143 = tpu.assume_multiple %142, 8 : i32
    %144 = arith.index_cast %143 : i32 to index
    %c0_72 = arith.constant 0 : index
    %145 = vector.load %arg8[%144, %c0_72] : memref<64x512xf32, #tpu.memory_space<vmem>>, vector<8x512xf32>
    %c0_73 = arith.constant 0 : index
    %c0_74 = arith.constant 0 : index
    %146 = vector.load %arg9[%c0_73, %c0_74] : memref<8x128xf32, #tpu.memory_space<vmem>>, vector<8x128xf32>
    %147 = arith.truncf %146 : vector<8x128xf32> to vector<8x128xbf16>
    %cst_75 = arith.constant dense<0.000000e+00> : vector<8x512xf32>
    %148 = tpu.matmul %147, %10, %cst_75 {dimension_numbers = #tpu.dot_dimension_numbers<[1], [0], [0], [1], [0, 0, 1, 1], [], []>} : vector<8x128xbf16>, vector<128x512xbf16>, vector<8x512xf32> -> vector<8x512xf32>
    %149 = arith.addf %145, %148 : vector<8x512xf32>
    %150 = vector.extract_strided_slice %149 {offsets = [0, 0], sizes = [8, 128], strides = [1, 1]} : vector<8x512xf32> to vector<8x128xf32>
    %151 = arith.negf %150 : vector<8x128xf32>
    %152 = math.exp %151 : vector<8x128xf32>
    %cst_76 = arith.constant 1.000000e+00 : f32
    %153 = vector.broadcast %cst_76 : f32 to vector<8x128xf32>
    %154 = arith.addf %153, %152 : vector<8x128xf32>
    %155 = arith.divf %153, %154 : vector<8x128xf32>
    %156 = vector.extract_strided_slice %149 {offsets = [0, 128], sizes = [8, 128], strides = [1, 1]} : vector<8x512xf32> to vector<8x128xf32>
    %157 = arith.negf %156 : vector<8x128xf32>
    %158 = math.exp %157 : vector<8x128xf32>
    %cst_77 = arith.constant 1.000000e+00 : f32
    %159 = vector.broadcast %cst_77 : f32 to vector<8x128xf32>
    %160 = arith.addf %159, %158 : vector<8x128xf32>
    %161 = arith.divf %159, %160 : vector<8x128xf32>
    %162 = vector.extract_strided_slice %149 {offsets = [0, 256], sizes = [8, 128], strides = [1, 1]} : vector<8x512xf32> to vector<8x128xf32>
    %163 = math.tanh %162 : vector<8x128xf32>
    %164 = vector.extract_strided_slice %149 {offsets = [0, 384], sizes = [8, 128], strides = [1, 1]} : vector<8x512xf32> to vector<8x128xf32>
    %165 = arith.negf %164 : vector<8x128xf32>
    %166 = math.exp %165 : vector<8x128xf32>
    %cst_78 = arith.constant 1.000000e+00 : f32
    %167 = vector.broadcast %cst_78 : f32 to vector<8x128xf32>
    %168 = arith.addf %167, %166 : vector<8x128xf32>
    %169 = arith.divf %167, %168 : vector<8x128xf32>
    %c0_79 = arith.constant 0 : index
    %c0_80 = arith.constant 0 : index
    %170 = vector.load %arg10[%c0_79, %c0_80] : memref<8x128xf32, #tpu.memory_space<vmem>>, vector<8x128xf32>
    %171 = arith.mulf %161, %170 : vector<8x128xf32>
    %172 = arith.mulf %155, %163 : vector<8x128xf32>
    %173 = arith.addf %171, %172 : vector<8x128xf32>
    %174 = math.tanh %173 : vector<8x128xf32>
    %175 = arith.mulf %169, %174 : vector<8x128xf32>
    %c8_i32_81 = arith.constant 8 : i32
    %176 = arith.cmpi slt, %141, %c8_i32_81 : i32
    %c0_82 = arith.constant 0 : index
    %c0_83 = arith.constant 0 : index
    %177 = vector.load %arg10[%c0_82, %c0_83] : memref<8x128xf32, #tpu.memory_space<vmem>>, vector<8x128xf32>
    %178 = arith.select %176, %173, %177 : vector<8x128xf32>
    %c0_84 = arith.constant 0 : index
    %c0_85 = arith.constant 0 : index
    %179 = vector.load %arg10[%c0_84, %c0_85] : memref<8x128xf32, #tpu.memory_space<vmem>>, vector<8x128xf32>
    tpu.vector_store %arg10[%c0_84, %c0_85], %178 {strides = array<i32>} : memref<8x128xf32, #tpu.memory_space<vmem>>, vector<8x128xf32>,
    %c0_86 = arith.constant 0 : index
    %c0_87 = arith.constant 0 : index
    %180 = vector.load %arg9[%c0_86, %c0_87] : memref<8x128xf32, #tpu.memory_space<vmem>>, vector<8x128xf32>
    %181 = arith.select %176, %175, %180 : vector<8x128xf32>
    %c0_88 = arith.constant 0 : index
    %c0_89 = arith.constant 0 : index
    %182 = vector.load %arg9[%c0_88, %c0_89] : memref<8x128xf32, #tpu.memory_space<vmem>>, vector<8x128xf32>
    tpu.vector_store %arg9[%c0_88, %c0_89], %181 {strides = array<i32>} : memref<8x128xf32, #tpu.memory_space<vmem>>, vector<8x128xf32>,
    %c4_i32 = arith.constant 4 : i32
    %c8_i32_90 = arith.constant 8 : i32
    %183 = arith.muli %arg0, %c8_i32_90 : i32
    %184 = arith.addi %183, %c4_i32 : i32
    %c8_i32_91 = arith.constant 8 : i32
    %185 = arith.muli %c4_i32, %c8_i32_91 : i32
    %186 = tpu.assume_multiple %185, 8 : i32
    %187 = arith.index_cast %186 : i32 to index
    %c0_92 = arith.constant 0 : index
    %188 = vector.load %arg8[%187, %c0_92] : memref<64x512xf32, #tpu.memory_space<vmem>>, vector<8x512xf32>
    %c0_93 = arith.constant 0 : index
    %c0_94 = arith.constant 0 : index
    %189 = vector.load %arg9[%c0_93, %c0_94] : memref<8x128xf32, #tpu.memory_space<vmem>>, vector<8x128xf32>
    %190 = arith.truncf %189 : vector<8x128xf32> to vector<8x128xbf16>
    %cst_95 = arith.constant dense<0.000000e+00> : vector<8x512xf32>
    %191 = tpu.matmul %190, %10, %cst_95 {dimension_numbers = #tpu.dot_dimension_numbers<[1], [0], [0], [1], [0, 0, 1, 1], [], []>} : vector<8x128xbf16>, vector<128x512xbf16>, vector<8x512xf32> -> vector<8x512xf32>
    %192 = arith.addf %188, %191 : vector<8x512xf32>
    %193 = vector.extract_strided_slice %192 {offsets = [0, 0], sizes = [8, 128], strides = [1, 1]} : vector<8x512xf32> to vector<8x128xf32>
    %194 = arith.negf %193 : vector<8x128xf32>
    %195 = math.exp %194 : vector<8x128xf32>
    %cst_96 = arith.constant 1.000000e+00 : f32
    %196 = vector.broadcast %cst_96 : f32 to vector<8x128xf32>
    %197 = arith.addf %196, %195 : vector<8x128xf32>
    %198 = arith.divf %196, %197 : vector<8x128xf32>
    %199 = vector.extract_strided_slice %192 {offsets = [0, 128], sizes = [8, 128], strides = [1, 1]} : vector<8x512xf32> to vector<8x128xf32>
    %200 = arith.negf %199 : vector<8x128xf32>
    %201 = math.exp %200 : vector<8x128xf32>
    %cst_97 = arith.constant 1.000000e+00 : f32
    %202 = vector.broadcast %cst_97 : f32 to vector<8x128xf32>
    %203 = arith.addf %202, %201 : vector<8x128xf32>
    %204 = arith.divf %202, %203 : vector<8x128xf32>
    %205 = vector.extract_strided_slice %192 {offsets = [0, 256], sizes = [8, 128], strides = [1, 1]} : vector<8x512xf32> to vector<8x128xf32>
    %206 = math.tanh %205 : vector<8x128xf32>
    %207 = vector.extract_strided_slice %192 {offsets = [0, 384], sizes = [8, 128], strides = [1, 1]} : vector<8x512xf32> to vector<8x128xf32>
    %208 = arith.negf %207 : vector<8x128xf32>
    %209 = math.exp %208 : vector<8x128xf32>
    %cst_98 = arith.constant 1.000000e+00 : f32
    %210 = vector.broadcast %cst_98 : f32 to vector<8x128xf32>
    %211 = arith.addf %210, %209 : vector<8x128xf32>
    %212 = arith.divf %210, %211 : vector<8x128xf32>
    %c0_99 = arith.constant 0 : index
    %c0_100 = arith.constant 0 : index
    %213 = vector.load %arg10[%c0_99, %c0_100] : memref<8x128xf32, #tpu.memory_space<vmem>>, vector<8x128xf32>
    %214 = arith.mulf %204, %213 : vector<8x128xf32>
    %215 = arith.mulf %198, %206 : vector<8x128xf32>
    %216 = arith.addf %214, %215 : vector<8x128xf32>
    %217 = math.tanh %216 : vector<8x128xf32>
    %218 = arith.mulf %212, %217 : vector<8x128xf32>
    %c8_i32_101 = arith.constant 8 : i32
    %219 = arith.cmpi slt, %184, %c8_i32_101 : i32
    %c0_102 = arith.constant 0 : index
    %c0_103 = arith.constant 0 : index
    %220 = vector.load %arg10[%c0_102, %c0_103] : memref<8x128xf32, #tpu.memory_space<vmem>>, vector<8x128xf32>
    %221 = arith.select %219, %216, %220 : vector<8x128xf32>
    %c0_104 = arith.constant 0 : index
    %c0_105 = arith.constant 0 : index
    %222 = vector.load %arg10[%c0_104, %c0_105] : memref<8x128xf32, #tpu.memory_space<vmem>>, vector<8x128xf32>
    tpu.vector_store %arg10[%c0_104, %c0_105], %221 {strides = array<i32>} : memref<8x128xf32, #tpu.memory_space<vmem>>, vector<8x128xf32>,
    %c0_106 = arith.constant 0 : index
    %c0_107 = arith.constant 0 : index
    %223 = vector.load %arg9[%c0_106, %c0_107] : memref<8x128xf32, #tpu.memory_space<vmem>>, vector<8x128xf32>
    %224 = arith.select %219, %218, %223 : vector<8x128xf32>
    %c0_108 = arith.constant 0 : index
    %c0_109 = arith.constant 0 : index
    %225 = vector.load %arg9[%c0_108, %c0_109] : memref<8x128xf32, #tpu.memory_space<vmem>>, vector<8x128xf32>
    tpu.vector_store %arg9[%c0_108, %c0_109], %224 {strides = array<i32>} : memref<8x128xf32, #tpu.memory_space<vmem>>, vector<8x128xf32>,
    %c5_i32 = arith.constant 5 : i32
    %c8_i32_110 = arith.constant 8 : i32
    %226 = arith.muli %arg0, %c8_i32_110 : i32
    %227 = arith.addi %226, %c5_i32 : i32
    %c8_i32_111 = arith.constant 8 : i32
    %228 = arith.muli %c5_i32, %c8_i32_111 : i32
    %229 = tpu.assume_multiple %228, 8 : i32
    %230 = arith.index_cast %229 : i32 to index
    %c0_112 = arith.constant 0 : index
    %231 = vector.load %arg8[%230, %c0_112] : memref<64x512xf32, #tpu.memory_space<vmem>>, vector<8x512xf32>
    %c0_113 = arith.constant 0 : index
    %c0_114 = arith.constant 0 : index
    %232 = vector.load %arg9[%c0_113, %c0_114] : memref<8x128xf32, #tpu.memory_space<vmem>>, vector<8x128xf32>
    %233 = arith.truncf %232 : vector<8x128xf32> to vector<8x128xbf16>
    %cst_115 = arith.constant dense<0.000000e+00> : vector<8x512xf32>
    %234 = tpu.matmul %233, %10, %cst_115 {dimension_numbers = #tpu.dot_dimension_numbers<[1], [0], [0], [1], [0, 0, 1, 1], [], []>} : vector<8x128xbf16>, vector<128x512xbf16>, vector<8x512xf32> -> vector<8x512xf32>
    %235 = arith.addf %231, %234 : vector<8x512xf32>
    %236 = vector.extract_strided_slice %235 {offsets = [0, 0], sizes = [8, 128], strides = [1, 1]} : vector<8x512xf32> to vector<8x128xf32>
    %237 = arith.negf %236 : vector<8x128xf32>
    %238 = math.exp %237 : vector<8x128xf32>
    %cst_116 = arith.constant 1.000000e+00 : f32
    %239 = vector.broadcast %cst_116 : f32 to vector<8x128xf32>
    %240 = arith.addf %239, %238 : vector<8x128xf32>
    %241 = arith.divf %239, %240 : vector<8x128xf32>
    %242 = vector.extract_strided_slice %235 {offsets = [0, 128], sizes = [8, 128], strides = [1, 1]} : vector<8x512xf32> to vector<8x128xf32>
    %243 = arith.negf %242 : vector<8x128xf32>
    %244 = math.exp %243 : vector<8x128xf32>
    %cst_117 = arith.constant 1.000000e+00 : f32
    %245 = vector.broadcast %cst_117 : f32 to vector<8x128xf32>
    %246 = arith.addf %245, %244 : vector<8x128xf32>
    %247 = arith.divf %245, %246 : vector<8x128xf32>
    %248 = vector.extract_strided_slice %235 {offsets = [0, 256], sizes = [8, 128], strides = [1, 1]} : vector<8x512xf32> to vector<8x128xf32>
    %249 = math.tanh %248 : vector<8x128xf32>
    %250 = vector.extract_strided_slice %235 {offsets = [0, 384], sizes = [8, 128], strides = [1, 1]} : vector<8x512xf32> to vector<8x128xf32>
    %251 = arith.negf %250 : vector<8x128xf32>
    %252 = math.exp %251 : vector<8x128xf32>
    %cst_118 = arith.constant 1.000000e+00 : f32
    %253 = vector.broadcast %cst_118 : f32 to vector<8x128xf32>
    %254 = arith.addf %253, %252 : vector<8x128xf32>
    %255 = arith.divf %253, %254 : vector<8x128xf32>
    %c0_119 = arith.constant 0 : index
    %c0_120 = arith.constant 0 : index
    %256 = vector.load %arg10[%c0_119, %c0_120] : memref<8x128xf32, #tpu.memory_space<vmem>>, vector<8x128xf32>
    %257 = arith.mulf %247, %256 : vector<8x128xf32>
    %258 = arith.mulf %241, %249 : vector<8x128xf32>
    %259 = arith.addf %257, %258 : vector<8x128xf32>
    %260 = math.tanh %259 : vector<8x128xf32>
    %261 = arith.mulf %255, %260 : vector<8x128xf32>
    %c8_i32_121 = arith.constant 8 : i32
    %262 = arith.cmpi slt, %227, %c8_i32_121 : i32
    %c0_122 = arith.constant 0 : index
    %c0_123 = arith.constant 0 : index
    %263 = vector.load %arg10[%c0_122, %c0_123] : memref<8x128xf32, #tpu.memory_space<vmem>>, vector<8x128xf32>
    %264 = arith.select %262, %259, %263 : vector<8x128xf32>
    %c0_124 = arith.constant 0 : index
    %c0_125 = arith.constant 0 : index
    %265 = vector.load %arg10[%c0_124, %c0_125] : memref<8x128xf32, #tpu.memory_space<vmem>>, vector<8x128xf32>
    tpu.vector_store %arg10[%c0_124, %c0_125], %264 {strides = array<i32>} : memref<8x128xf32, #tpu.memory_space<vmem>>, vector<8x128xf32>,
    %c0_126 = arith.constant 0 : index
    %c0_127 = arith.constant 0 : index
    %266 = vector.load %arg9[%c0_126, %c0_127] : memref<8x128xf32, #tpu.memory_space<vmem>>, vector<8x128xf32>
    %267 = arith.select %262, %261, %266 : vector<8x128xf32>
    %c0_128 = arith.constant 0 : index
    %c0_129 = arith.constant 0 : index
    %268 = vector.load %arg9[%c0_128, %c0_129] : memref<8x128xf32, #tpu.memory_space<vmem>>, vector<8x128xf32>
    tpu.vector_store %arg9[%c0_128, %c0_129], %267 {strides = array<i32>} : memref<8x128xf32, #tpu.memory_space<vmem>>, vector<8x128xf32>,
    %c6_i32 = arith.constant 6 : i32
    %c8_i32_130 = arith.constant 8 : i32
    %269 = arith.muli %arg0, %c8_i32_130 : i32
    %270 = arith.addi %269, %c6_i32 : i32
    %c8_i32_131 = arith.constant 8 : i32
    %271 = arith.muli %c6_i32, %c8_i32_131 : i32
    %272 = tpu.assume_multiple %271, 8 : i32
    %273 = arith.index_cast %272 : i32 to index
    %c0_132 = arith.constant 0 : index
    %274 = vector.load %arg8[%273, %c0_132] : memref<64x512xf32, #tpu.memory_space<vmem>>, vector<8x512xf32>
    %c0_133 = arith.constant 0 : index
    %c0_134 = arith.constant 0 : index
    %275 = vector.load %arg9[%c0_133, %c0_134] : memref<8x128xf32, #tpu.memory_space<vmem>>, vector<8x128xf32>
    %276 = arith.truncf %275 : vector<8x128xf32> to vector<8x128xbf16>
    %cst_135 = arith.constant dense<0.000000e+00> : vector<8x512xf32>
    %277 = tpu.matmul %276, %10, %cst_135 {dimension_numbers = #tpu.dot_dimension_numbers<[1], [0], [0], [1], [0, 0, 1, 1], [], []>} : vector<8x128xbf16>, vector<128x512xbf16>, vector<8x512xf32> -> vector<8x512xf32>
    %278 = arith.addf %274, %277 : vector<8x512xf32>
    %279 = vector.extract_strided_slice %278 {offsets = [0, 0], sizes = [8, 128], strides = [1, 1]} : vector<8x512xf32> to vector<8x128xf32>
    %280 = arith.negf %279 : vector<8x128xf32>
    %281 = math.exp %280 : vector<8x128xf32>
    %cst_136 = arith.constant 1.000000e+00 : f32
    %282 = vector.broadcast %cst_136 : f32 to vector<8x128xf32>
    %283 = arith.addf %282, %281 : vector<8x128xf32>
    %284 = arith.divf %282, %283 : vector<8x128xf32>
    %285 = vector.extract_strided_slice %278 {offsets = [0, 128], sizes = [8, 128], strides = [1, 1]} : vector<8x512xf32> to vector<8x128xf32>
    %286 = arith.negf %285 : vector<8x128xf32>
    %287 = math.exp %286 : vector<8x128xf32>
    %cst_137 = arith.constant 1.000000e+00 : f32
    %288 = vector.broadcast %cst_137 : f32 to vector<8x128xf32>
    %289 = arith.addf %288, %287 : vector<8x128xf32>
    %290 = arith.divf %288, %289 : vector<8x128xf32>
    %291 = vector.extract_strided_slice %278 {offsets = [0, 256], sizes = [8, 128], strides = [1, 1]} : vector<8x512xf32> to vector<8x128xf32>
    %292 = math.tanh %291 : vector<8x128xf32>
    %293 = vector.extract_strided_slice %278 {offsets = [0, 384], sizes = [8, 128], strides = [1, 1]} : vector<8x512xf32> to vector<8x128xf32>
    %294 = arith.negf %293 : vector<8x128xf32>
    %295 = math.exp %294 : vector<8x128xf32>
    %cst_138 = arith.constant 1.000000e+00 : f32
    %296 = vector.broadcast %cst_138 : f32 to vector<8x128xf32>
    %297 = arith.addf %296, %295 : vector<8x128xf32>
    %298 = arith.divf %296, %297 : vector<8x128xf32>
    %c0_139 = arith.constant 0 : index
    %c0_140 = arith.constant 0 : index
    %299 = vector.load %arg10[%c0_139, %c0_140] : memref<8x128xf32, #tpu.memory_space<vmem>>, vector<8x128xf32>
    %300 = arith.mulf %290, %299 : vector<8x128xf32>
    %301 = arith.mulf %284, %292 : vector<8x128xf32>
    %302 = arith.addf %300, %301 : vector<8x128xf32>
    %303 = math.tanh %302 : vector<8x128xf32>
    %304 = arith.mulf %298, %303 : vector<8x128xf32>
    %c8_i32_141 = arith.constant 8 : i32
    %305 = arith.cmpi slt, %270, %c8_i32_141 : i32
    %c0_142 = arith.constant 0 : index
    %c0_143 = arith.constant 0 : index
    %306 = vector.load %arg10[%c0_142, %c0_143] : memref<8x128xf32, #tpu.memory_space<vmem>>, vector<8x128xf32>
    %307 = arith.select %305, %302, %306 : vector<8x128xf32>
    %c0_144 = arith.constant 0 : index
    %c0_145 = arith.constant 0 : index
    %308 = vector.load %arg10[%c0_144, %c0_145] : memref<8x128xf32, #tpu.memory_space<vmem>>, vector<8x128xf32>
    tpu.vector_store %arg10[%c0_144, %c0_145], %307 {strides = array<i32>} : memref<8x128xf32, #tpu.memory_space<vmem>>, vector<8x128xf32>,
    %c0_146 = arith.constant 0 : index
    %c0_147 = arith.constant 0 : index
    %309 = vector.load %arg9[%c0_146, %c0_147] : memref<8x128xf32, #tpu.memory_space<vmem>>, vector<8x128xf32>
    %310 = arith.select %305, %304, %309 : vector<8x128xf32>
    %c0_148 = arith.constant 0 : index
    %c0_149 = arith.constant 0 : index
    %311 = vector.load %arg9[%c0_148, %c0_149] : memref<8x128xf32, #tpu.memory_space<vmem>>, vector<8x128xf32>
    tpu.vector_store %arg9[%c0_148, %c0_149], %310 {strides = array<i32>} : memref<8x128xf32, #tpu.memory_space<vmem>>, vector<8x128xf32>,
    %c7_i32 = arith.constant 7 : i32
    %c8_i32_150 = arith.constant 8 : i32
    %312 = arith.muli %arg0, %c8_i32_150 : i32
    %313 = arith.addi %312, %c7_i32 : i32
    %c8_i32_151 = arith.constant 8 : i32
    %314 = arith.muli %c7_i32, %c8_i32_151 : i32
    %315 = tpu.assume_multiple %314, 8 : i32
    %316 = arith.index_cast %315 : i32 to index
    %c0_152 = arith.constant 0 : index
    %317 = vector.load %arg8[%316, %c0_152] : memref<64x512xf32, #tpu.memory_space<vmem>>, vector<8x512xf32>
    %c0_153 = arith.constant 0 : index
    %c0_154 = arith.constant 0 : index
    %318 = vector.load %arg9[%c0_153, %c0_154] : memref<8x128xf32, #tpu.memory_space<vmem>>, vector<8x128xf32>
    %319 = arith.truncf %318 : vector<8x128xf32> to vector<8x128xbf16>
    %cst_155 = arith.constant dense<0.000000e+00> : vector<8x512xf32>
    %320 = tpu.matmul %319, %10, %cst_155 {dimension_numbers = #tpu.dot_dimension_numbers<[1], [0], [0], [1], [0, 0, 1, 1], [], []>} : vector<8x128xbf16>, vector<128x512xbf16>, vector<8x512xf32> -> vector<8x512xf32>
    %321 = arith.addf %317, %320 : vector<8x512xf32>
    %322 = vector.extract_strided_slice %321 {offsets = [0, 0], sizes = [8, 128], strides = [1, 1]} : vector<8x512xf32> to vector<8x128xf32>
    %323 = arith.negf %322 : vector<8x128xf32>
    %324 = math.exp %323 : vector<8x128xf32>
    %cst_156 = arith.constant 1.000000e+00 : f32
    %325 = vector.broadcast %cst_156 : f32 to vector<8x128xf32>
    %326 = arith.addf %325, %324 : vector<8x128xf32>
    %327 = arith.divf %325, %326 : vector<8x128xf32>
    %328 = vector.extract_strided_slice %321 {offsets = [0, 128], sizes = [8, 128], strides = [1, 1]} : vector<8x512xf32> to vector<8x128xf32>
    %329 = arith.negf %328 : vector<8x128xf32>
    %330 = math.exp %329 : vector<8x128xf32>
    %cst_157 = arith.constant 1.000000e+00 : f32
    %331 = vector.broadcast %cst_157 : f32 to vector<8x128xf32>
    %332 = arith.addf %331, %330 : vector<8x128xf32>
    %333 = arith.divf %331, %332 : vector<8x128xf32>
    %334 = vector.extract_strided_slice %321 {offsets = [0, 256], sizes = [8, 128], strides = [1, 1]} : vector<8x512xf32> to vector<8x128xf32>
    %335 = math.tanh %334 : vector<8x128xf32>
    %336 = vector.extract_strided_slice %321 {offsets = [0, 384], sizes = [8, 128], strides = [1, 1]} : vector<8x512xf32> to vector<8x128xf32>
    %337 = arith.negf %336 : vector<8x128xf32>
    %338 = math.exp %337 : vector<8x128xf32>
    %cst_158 = arith.constant 1.000000e+00 : f32
    %339 = vector.broadcast %cst_158 : f32 to vector<8x128xf32>
    %340 = arith.addf %339, %338 : vector<8x128xf32>
    %341 = arith.divf %339, %340 : vector<8x128xf32>
    %c0_159 = arith.constant 0 : index
    %c0_160 = arith.constant 0 : index
    %342 = vector.load %arg10[%c0_159, %c0_160] : memref<8x128xf32, #tpu.memory_space<vmem>>, vector<8x128xf32>
    %343 = arith.mulf %333, %342 : vector<8x128xf32>
    %344 = arith.mulf %327, %335 : vector<8x128xf32>
    %345 = arith.addf %343, %344 : vector<8x128xf32>
    %346 = math.tanh %345 : vector<8x128xf32>
    %347 = arith.mulf %341, %346 : vector<8x128xf32>
    %c8_i32_161 = arith.constant 8 : i32
    %348 = arith.cmpi slt, %313, %c8_i32_161 : i32
    %c0_162 = arith.constant 0 : index
    %c0_163 = arith.constant 0 : index
    %349 = vector.load %arg10[%c0_162, %c0_163] : memref<8x128xf32, #tpu.memory_space<vmem>>, vector<8x128xf32>
    %350 = arith.select %348, %345, %349 : vector<8x128xf32>
    %c0_164 = arith.constant 0 : index
    %c0_165 = arith.constant 0 : index
    %351 = vector.load %arg10[%c0_164, %c0_165] : memref<8x128xf32, #tpu.memory_space<vmem>>, vector<8x128xf32>
    tpu.vector_store %arg10[%c0_164, %c0_165], %350 {strides = array<i32>} : memref<8x128xf32, #tpu.memory_space<vmem>>, vector<8x128xf32>,
    %c0_166 = arith.constant 0 : index
    %c0_167 = arith.constant 0 : index
    %352 = vector.load %arg9[%c0_166, %c0_167] : memref<8x128xf32, #tpu.memory_space<vmem>>, vector<8x128xf32>
    %353 = arith.select %348, %347, %352 : vector<8x128xf32>
    %c0_168 = arith.constant 0 : index
    %c0_169 = arith.constant 0 : index
    %354 = vector.load %arg9[%c0_168, %c0_169] : memref<8x128xf32, #tpu.memory_space<vmem>>, vector<8x128xf32>
    tpu.vector_store %arg9[%c0_168, %c0_169], %353 {strides = array<i32>} : memref<8x128xf32, #tpu.memory_space<vmem>>, vector<8x128xf32>,
    %c8_i32_170 = arith.constant 8 : i32
    %c0_i32_171 = arith.constant 0 : i32
    %355 = arith.cmpi eq, %arg0, %c0_i32_171 : i32
    %356 = arith.extui %355 : i1 to i32
    %c0_i32_172 = arith.constant 0 : i32
    %357 = arith.cmpi ne, %356, %c0_i32_172 : i32
    scf.if %357 {
      %c0_173 = arith.constant 0 : index
      %c0_174 = arith.constant 0 : index
      %358 = vector.load %arg9[%c0_173, %c0_174] : memref<8x128xf32, #tpu.memory_space<vmem>>, vector<8x128xf32>
      %359 = arith.truncf %358 : vector<8x128xf32> to vector<8x128xbf16>
      %c0_175 = arith.constant 0 : index
      %c0_176 = arith.constant 0 : index
      %360 = vector.load %arg5[%c0_175, %c0_176] : memref<128x128xbf16, #tpu.memory_space<vmem>>, vector<128x128xbf16>
      %cst_177 = arith.constant dense<0.000000e+00> : vector<8x128xf32>
      %361 = tpu.matmul %359, %360, %cst_177 {dimension_numbers = #tpu.dot_dimension_numbers<[1], [0], [0], [1], [0, 0, 1, 1], [], []>} : vector<8x128xbf16>, vector<128x128xbf16>, vector<8x128xf32> -> vector<8x128xf32>
      %c0_178 = arith.constant 0 : index
      %c0_179 = arith.constant 0 : index
      %362 = vector.load %arg6[%c0_178, %c0_179] : memref<1x128xf32, #tpu.memory_space<vmem>>, vector<1x128xf32>
      %363 = vector.broadcast %362 : vector<1x128xf32> to vector<8x128xf32>
      %364 = arith.addf %361, %363 : vector<8x128xf32>
      %c0_180 = arith.constant 0 : index
      %c0_181 = arith.constant 0 : index
      %365 = vector.load %arg7[%c0_180, %c0_181] : memref<8x128xf32, #tpu.memory_space<vmem>>, vector<8x128xf32>
      tpu.vector_store %arg7[%c0_180, %c0_181], %364 {strides = array<i32>} : memref<8x128xf32, #tpu.memory_space<vmem>>, vector<8x128xf32>,
    } else {
    }
    return
  }
  func.func @transform_0(%arg0: i32) -> (i32, i32) {
    %c0_i32 = arith.constant 0 : i32
    %c0_i32_0 = arith.constant 0 : i32
    return %arg0, %c0_i32 : i32, i32
  }
  func.func @transform_1(%arg0: i32) -> (i32, i32) {
    %c0_i32 = arith.constant 0 : i32
    %c0_i32_0 = arith.constant 0 : i32
    %c0_i32_1 = arith.constant 0 : i32
    return %c0_i32, %c0_i32_0 : i32, i32
  }
  func.func @transform_2(%arg0: i32) -> (i32, i32) {
    %c0_i32 = arith.constant 0 : i32
    %c0_i32_0 = arith.constant 0 : i32
    %c0_i32_1 = arith.constant 0 : i32
    return %c0_i32, %c0_i32_0 : i32, i32
  }
  func.func @transform_3(%arg0: i32) -> (i32, i32) {
    %c0_i32 = arith.constant 0 : i32
    %c0_i32_0 = arith.constant 0 : i32
    %c0_i32_1 = arith.constant 0 : i32
    return %c0_i32, %c0_i32_0 : i32, i32
  }
  func.func @transform_4(%arg0: i32) -> (i32, i32) {
    %c0_i32 = arith.constant 0 : i32
    %c0_i32_0 = arith.constant 0 : i32
    %c0_i32_1 = arith.constant 0 : i32
    return %c0_i32, %c0_i32_0 : i32, i32
  }
  func.func @transform_5(%arg0: i32) -> (i32, i32) {
    %c0_i32 = arith.constant 0 : i32
    %c0_i32_0 = arith.constant 0 : i32
    %c0_i32_1 = arith.constant 0 : i32
    return %c0_i32, %c0_i32_0 : i32, i32
  }
  func.func @transform_6(%arg0: i32) -> (i32, i32) {
    %c0_i32 = arith.constant 0 : i32
    %c0_i32_0 = arith.constant 0 : i32
    %c0_i32_1 = arith.constant 0 : i32
    return %c0_i32, %c0_i32_0 : i32, i32
  }
}

</mosaic_0001>

<llo_original>
// kernel: tpu_custom_call.1
$region0: #{tpu_custom_call.1}
  #allocation0 [shape = 'u32[]', space=smem, size = 0x4, offset = 0x4, fixed_abs, tag = 'smem constant byte address 0x4 - core index']
  #allocation1 [shape = 'u32[72,128]{1,0:T(1,128)}', space=vmem, size = 0x9000, scoped, tag = 'internal scratch']
  #allocation2 [shape = 'f32[64,512]{1,0:T(8,128)}', space=vmem, size = 0x20000, scoped, tag = 'scratch operand']
  #allocation3 [shape = 'f32[8,128]{1,0:T(8,128)}', space=vmem, size = 0x1000, scoped, tag = 'scratch operand']
  #allocation4 [shape = 'f32[8,128]{1,0:T(8,128)}', space=vmem, size = 0x1000, scoped, tag = 'scratch operand']
  %s0 = inlined_call_operand.vmem [shape: bf16[64,16], index: 0, kind: input, shape index: {}]
  %s1 = inlined_call_operand.vmem [shape: bf16[16,512], index: 1, kind: input, shape index: {}]
  %s2 = inlined_call_operand.vmem [shape: f32[1,512], index: 2, kind: input, shape index: {}]
  %s3 = inlined_call_operand.hbm [shape: bf16[128,512], index: 3, kind: input, shape index: {}]
  %s4 = inlined_call_operand.hbm [shape: bf16[128,128], index: 4, kind: input, shape index: {}]
  %s5 = inlined_call_operand.vmem [shape: f32[1,128], index: 5, kind: input, shape index: {}]
  %s6 = inlined_call_operand.hbm [shape: f32[8,128], index: 6, kind: output, shape index: {}]
  %s7 = sld [smem:[#allocation0]]
  $region50: #{tpu_custom_call.1} parent=0
    _
  %s9 = ssub.s32 1, %s7
  %s10 = scalar_select 0, %s9, %s7
  $region1: #{tpu_custom_call.1} parent=0
    #allocation5 [shape = 'u8[131072]{0}', space=vmem, size = 0x20000, scoped, tag = 'input window, operand 3, single buffered']
    #allocation6 [shape = 's32[1]{0}', space=sflag, size = 0x4, scoped, tag = 'scoped memory for tpu_custom_call.1']
    #allocation7 [shape = 's32[1]{0}', space=sflag, size = 0x4, scoped, tag = 'scoped memory for tpu_custom_call.1']
    #allocation8 [shape = 'u8[32768]{0}', space=vmem, size = 0x8000, scoped, tag = 'input window, operand 4, single buffered']
    #allocation9 [shape = 's32[1]{0}', space=sflag, size = 0x4, scoped, tag = 'scoped memory for tpu_custom_call.1']
    #allocation10 [shape = 'u8[4096]{0}', space=vmem, size = 0x1000, scoped, tag = 'output window, operand 0, single buffered']
    %11 = vsyncpa [#allocation6], 0
    %12 = vsyncpa [#allocation9], 0
    %13 = vsyncpa [#allocation7], 0
    // Predicated region
    $region2: #{tpu_custom_call.1} parent=1 // pred_check
      _
    $region3: #{tpu_custom_call.1} parent=1 // pred_check_branch
      %15 = sbr.rel (0) target = $region5
    $region4: #{tpu_custom_call.1} parent=1 // pred_region
      _
    $region5: #{tpu_custom_call.1} parent=1 // pred_fallthru
      _
    // Predicated region
    $region6: #{tpu_custom_call.1} parent=1 // pred_check
      _
    $region7: #{tpu_custom_call.1} parent=1 // pred_check_branch
      %17 = sbr.rel (0) target = $region9
    $region8: #{tpu_custom_call.1} parent=1 // pred_region
      _
    $region9: #{tpu_custom_call.1} parent=1 // pred_fallthru
      _
    // Predicated region
    $region10: #{tpu_custom_call.1} parent=1 // pred_check
      _
    $region11: #{tpu_custom_call.1} parent=1 // pred_check_branch
      %19 = sbr.rel (0) target = $region13
    $region12: #{tpu_custom_call.1} parent=1 // pred_region
      _
    $region13: #{tpu_custom_call.1} parent=1 // pred_fallthru
      _
    // Predicated region
    $region14: #{tpu_custom_call.1} parent=1 // pred_check
      _
    $region15: #{tpu_custom_call.1} parent=1 // pred_check_branch
      %21 = sbr.rel (0) target = $region17
    $region16: #{tpu_custom_call.1} parent=1 // pred_region
      %23 = vsyncadd [#allocation6], 0
      %s24 = sshll.u32 %s3, 4
      %s25 = int_to_ptr.hbm [resolvable:$true] %s24
      %s26 = sshll.u32 [#allocation5], 4
      %s27 = int_to_ptr.vmem [resolvable:$true] %s26
      %32 = dma.hbm_to_vmem [thread:$0]  %s25, 4096, %s27, [#allocation6], 256, 256, 16
    $region17: #{tpu_custom_call.1} parent=1 // pred_fallthru
      _
    // Predicated region
    $region18: #{tpu_custom_call.1} parent=1 // pred_check
      _
    $region19: #{tpu_custom_call.1} parent=1 // pred_check_branch
      %34 = sbr.rel (0) target = $region21
    $region20: #{tpu_custom_call.1} parent=1 // pred_region
      %36 = vsyncadd [#allocation9], 0
      %s37 = sshll.u32 %s4, 4
      %s38 = int_to_ptr.hbm [resolvable:$true] %s37
      %s39 = sshll.u32 [#allocation8], 4
      %s40 = int_to_ptr.vmem [resolvable:$true] %s39
      %45 = dma.hbm_to_vmem [thread:$0]  %s38, 1024, %s40, [#allocation9], 64, 64, 4
    $region21: #{tpu_custom_call.1} parent=1 // pred_fallthru
      _
    // Predicated region
    $region22: #{tpu_custom_call.1} parent=1 // pred_check
      _
    $region23: #{tpu_custom_call.1} parent=1 // pred_check_branch
      %47 = sbr.rel (0) target = $region25
    $region24: #{tpu_custom_call.1} parent=1 // pred_region
      _
    $region25: #{tpu_custom_call.1} parent=1 // pred_fallthru
      _
    // Predicated region
    $region26: #{tpu_custom_call.1} parent=1 // pred_check
      _
    $region27: #{tpu_custom_call.1} parent=1 // pred_check_branch
      %49 = sbr.rel (0) target = $region29
    $region28: #{tpu_custom_call.1} parent=1 // pred_region
      %51 = dma.done [#allocation6], 4096
    $region29: #{tpu_custom_call.1} parent=1 // pred_fallthru
      _
    // Predicated region
    $region30: #{tpu_custom_call.1} parent=1 // pred_check
      _
    $region31: #{tpu_custom_call.1} parent=1 // pred_check_branch
      %53 = sbr.rel (0) target = $region33
    $region32: #{tpu_custom_call.1} parent=1 // pred_region
      %55 = dma.done [#allocation9], 1024
    $region33: #{tpu_custom_call.1} parent=1 // pred_fallthru
      _
    %p57 = scmp.eq.s32.totalorder 0, 0
    // Predicated region
    $region34: #{tpu_custom_call.1} parent=1 // pred_check
      %p58 = pneg %p57
    $region35: #{tpu_custom_call.1} parent=1 // pred_check_branch
      %60 = sbr.rel (%p58) target = $region37
    $region36: #{tpu_custom_call.1} parent=1 // pred_region
      %61 = vst [vmem:[#allocation3] sm:$0xff] 0.0
      %62 = vst [vmem:[#allocation4] sm:$0xff] 0.0
    $region37: #{tpu_custom_call.1} parent=1 // pred_fallthru
      _
    %v63 = vld [vmem:[%s0] sm:$0xf]
    %v64 = vld [vmem:[%s0 + $0x4] sm:$0xf]
    %v65 = vld [vmem:[%s0 + $0x8] sm:$0xf]
    %v66 = vld [vmem:[%s0 + $0xc] sm:$0xf]
    %v67 = vld [vmem:[%s0 + $0x10] sm:$0xf]
    %v68 = vld [vmem:[%s0 + $0x14] sm:$0xf]
    %v69 = vld [vmem:[%s0 + $0x18] sm:$0xf]
    %v70 = vld [vmem:[%s0 + $0x1c] sm:$0xf]
    %v71 = vld [vmem:[%s1] sm:$0xff]
    %v72 = vld [vmem:[%s1 + $0x8] sm:$0xff]
    %v73 = vld [vmem:[%s1 + $0x10] sm:$0xff]
    %v74 = vld [vmem:[%s1 + $0x18] sm:$0xff]
    %v75 = vld [vmem:[%s2] sm:$0xf]
    %v77 = vperm.slane %v75, 0
    %v78 = vperm.slane %v75, 1
    %v79 = vperm.slane %v75, 2
    %v80 = vperm.slane %v75, 3
    %v93 = vunpack.c.l.b16 %v63
    %v94 = vunpack.c.l.b16 %v64
    %v95 = vunpack.c.l.b16 %v65
    %v96 = vunpack.c.l.b16 %v66
    %v97 = vunpack.c.l.b16 %v67
    %v98 = vunpack.c.l.b16 %v68
    %v99 = vunpack.c.l.b16 %v69
    %v100 = vunpack.c.l.b16 %v70
    %v101 = vpack.c.b16 %v94, %v93
    %v102 = vpack.c.b16 %v96, %v95
    %v103 = vpack.c.b16 %v98, %v97
    %v104 = vpack.c.b16 %v100, %v99
    %v109 = vunpack.c.l.b16 %v71
    %v110 = vunpack.c.h.b16 %v71
    %v111 = vunpack.c.l.b16 %v72
    %v112 = vunpack.c.h.b16 %v72
    %v113 = vunpack.c.l.b16 %v73
    %v114 = vunpack.c.h.b16 %v73
    %v115 = vunpack.c.l.b16 %v74
    %v116 = vunpack.c.h.b16 %v74
    %v117 = vpack.c.b16 %v113, %v109
    %v118 = vpack.c.b16 %v114, %v110
    %v119 = vpack.c.b16 %v115, %v111
    %v120 = vpack.c.b16 %v116, %v112
    %vm125 = vcmask 130048
    %v127 = vsel %vm125, %v101, 0
    %v130 = vsel %vm125, %v102, 0
    %v133 = vsel %vm125, %v103, 0
    %v136 = vsel %vm125, %v104, 0
    %138 = vmatpush.bf16.msra.mxu0 0
    %139 = vmatpush.bf16.msra.mxu0 0
    %140 = vmatpush.bf16.msra.mxu0 0
    %141 = vmatpush.bf16.msra.mxu0 0
    %142 = vmatpush.bf16.msra.mxu0 0
    %143 = vmatpush.bf16.msra.mxu0 0
    %144 = vmatpush.bf16.msra.mxu0 0
    %145 = vmatpush.bf16.msra.mxu0 %v117
    %146 = vmatmul.bf16.gmra.mxu0 %v127
    %v147 = vpop.f32.mrf.mxu0
    %v148 = vadd.f32 %v77, %v147
    %v149 = vpop.f32.mrf.mxu0
    %v150 = vadd.f32 %v77, %v149
    %151 = vmatmul.bf16.gmra.mxu0 %v130
    %v152 = vpop.f32.mrf.mxu0
    %v153 = vadd.f32 %v77, %v152
    %v154 = vpop.f32.mrf.mxu0
    %v155 = vadd.f32 %v77, %v154
    %156 = vmatmul.bf16.gmra.mxu0 %v133
    %v157 = vpop.f32.mrf.mxu0
    %v158 = vadd.f32 %v77, %v157
    %v159 = vpop.f32.mrf.mxu0
    %v160 = vadd.f32 %v77, %v159
    %161 = vmatmul.bf16.gmra.mxu0 %v136
    %v162 = vpop.f32.mrf.mxu0
    %v163 = vadd.f32 %v77, %v162
    %v164 = vpop.f32.mrf.mxu0
    %v165 = vadd.f32 %v77, %v164
    %166 = vdwg.mxu0
    %167 = vmatpush.bf16.msra.mxu0 0
    %168 = vmatpush.bf16.msra.mxu0 0
    %169 = vmatpush.bf16.msra.mxu0 0
    %170 = vmatpush.bf16.msra.mxu0 0
    %171 = vmatpush.bf16.msra.mxu0 0
    %172 = vmatpush.bf16.msra.mxu0 0
    %173 = vmatpush.bf16.msra.mxu0 0
    %174 = vmatpush.bf16.msra.mxu0 %v118
    %175 = vmatmul.bf16.gmra.mxu0 %v127
    %v176 = vpop.f32.mrf.mxu0
    %v177 = vadd.f32 %v78, %v176
    %v178 = vpop.f32.mrf.mxu0
    %v179 = vadd.f32 %v78, %v178
    %180 = vmatmul.bf16.gmra.mxu0 %v130
    %v181 = vpop.f32.mrf.mxu0
    %v182 = vadd.f32 %v78, %v181
    %v183 = vpop.f32.mrf.mxu0
    %v184 = vadd.f32 %v78, %v183
    %185 = vmatmul.bf16.gmra.mxu0 %v133
    %v186 = vpop.f32.mrf.mxu0
    %v187 = vadd.f32 %v78, %v186
    %v188 = vpop.f32.mrf.mxu0
    %v189 = vadd.f32 %v78, %v188
    %190 = vmatmul.bf16.gmra.mxu0 %v136
    %v191 = vpop.f32.mrf.mxu0
    %v192 = vadd.f32 %v78, %v191
    %v193 = vpop.f32.mrf.mxu0
    %v194 = vadd.f32 %v78, %v193
    %195 = vdwg.mxu0
    %196 = vmatpush.bf16.msra.mxu0 0
    %197 = vmatpush.bf16.msra.mxu0 0
    %198 = vmatpush.bf16.msra.mxu0 0
    %199 = vmatpush.bf16.msra.mxu0 0
    %200 = vmatpush.bf16.msra.mxu0 0
    %201 = vmatpush.bf16.msra.mxu0 0
    %202 = vmatpush.bf16.msra.mxu0 0
    %203 = vmatpush.bf16.msra.mxu0 %v119
    %204 = vmatmul.bf16.gmra.mxu0 %v127
    %v205 = vpop.f32.mrf.mxu0
    %v206 = vadd.f32 %v79, %v205
    %v207 = vpop.f32.mrf.mxu0
    %v208 = vadd.f32 %v79, %v207
    %209 = vmatmul.bf16.gmra.mxu0 %v130
    %v210 = vpop.f32.mrf.mxu0
    %v211 = vadd.f32 %v79, %v210
    %v212 = vpop.f32.mrf.mxu0
    %v213 = vadd.f32 %v79, %v212
    %214 = vmatmul.bf16.gmra.mxu0 %v133
    %v215 = vpop.f32.mrf.mxu0
    %v216 = vadd.f32 %v79, %v215
    %v217 = vpop.f32.mrf.mxu0
    %v218 = vadd.f32 %v79, %v217
    %219 = vmatmul.bf16.gmra.mxu0 %v136
    %v220 = vpop.f32.mrf.mxu0
    %v221 = vadd.f32 %v79, %v220
    %v222 = vpop.f32.mrf.mxu0
    %v223 = vadd.f32 %v79, %v222
    %224 = vdwg.mxu0
    %225 = vmatpush.bf16.msra.mxu0 0
    %226 = vmatpush.bf16.msra.mxu0 0
    %227 = vmatpush.bf16.msra.mxu0 0
    %228 = vmatpush.bf16.msra.mxu0 0
    %229 = vmatpush.bf16.msra.mxu0 0
    %230 = vmatpush.bf16.msra.mxu0 0
    %231 = vmatpush.bf16.msra.mxu0 0
    %232 = vmatpush.bf16.msra.mxu0 %v120
    %233 = vmatmul.bf16.gmra.mxu0 %v127
    %v234 = vpop.f32.mrf.mxu0
    %v235 = vadd.f32 %v80, %v234
    %v236 = vpop.f32.mrf.mxu0
    %v237 = vadd.f32 %v80, %v236
    %238 = vmatmul.bf16.gmra.mxu0 %v130
    %v239 = vpop.f32.mrf.mxu0
    %v240 = vadd.f32 %v80, %v239
    %v241 = vpop.f32.mrf.mxu0
    %v242 = vadd.f32 %v80, %v241
    %243 = vmatmul.bf16.gmra.mxu0 %v133
    %v244 = vpop.f32.mrf.mxu0
    %v245 = vadd.f32 %v80, %v244
    %v246 = vpop.f32.mrf.mxu0
    %v247 = vadd.f32 %v80, %v246
    %248 = vmatmul.bf16.gmra.mxu0 %v136
    %v249 = vpop.f32.mrf.mxu0
    %v250 = vadd.f32 %v80, %v249
    %v251 = vpop.f32.mrf.mxu0
    %v252 = vadd.f32 %v80, %v251
    %253 = vdwg.mxu0
    %254 = vst [vmem:[#allocation2] sm:$0xff] %v148
    %255 = vst [vmem:[#allocation2 + $0x8] sm:$0xff] %v177
    %256 = vst [vmem:[#allocation2 + $0x10] sm:$0xff] %v206
    %257 = vst [vmem:[#allocation2 + $0x18] sm:$0xff] %v235
    %258 = vst [vmem:[#allocation2 + $0x20] sm:$0xff] %v150
    %259 = vst [vmem:[#allocation2 + $0x28] sm:$0xff] %v179
    %260 = vst [vmem:[#allocation2 + $0x30] sm:$0xff] %v208
    %261 = vst [vmem:[#allocation2 + $0x38] sm:$0xff] %v237
    %262 = vst [vmem:[#allocation2 + $0x40] sm:$0xff] %v153
    %263 = vst [vmem:[#allocation2 + $0x48] sm:$0xff] %v182
    %264 = vst [vmem:[#allocation2 + $0x50] sm:$0xff] %v211
    %265 = vst [vmem:[#allocation2 + $0x58] sm:$0xff] %v240
    %266 = vst [vmem:[#allocation2 + $0x60] sm:$0xff] %v155
    %267 = vst [vmem:[#allocation2 + $0x68] sm:$0xff] %v184
    %268 = vst [vmem:[#allocation2 + $0x70] sm:$0xff] %v213
    %269 = vst [vmem:[#allocation2 + $0x78] sm:$0xff] %v242
    %270 = vst [vmem:[#allocation2 + $0x80] sm:$0xff] %v158
    %271 = vst [vmem:[#allocation2 + $0x88] sm:$0xff] %v187
    %272 = vst [vmem:[#allocation2 + $0x90] sm:$0xff] %v216
    %273 = vst [vmem:[#allocation2 + $0x98] sm:$0xff] %v245
    %274 = vst [vmem:[#allocation2 + $0xa0] sm:$0xff] %v160
    %275 = vst [vmem:[#allocation2 + $0xa8] sm:$0xff] %v189
    %276 = vst [vmem:[#allocation2 + $0xb0] sm:$0xff] %v218
    %277 = vst [vmem:[#allocation2 + $0xb8] sm:$0xff] %v247
    %278 = vst [vmem:[#allocation2 + $0xc0] sm:$0xff] %v163
    %279 = vst [vmem:[#allocation2 + $0xc8] sm:$0xff] %v192
    %280 = vst [vmem:[#allocation2 + $0xd0] sm:$0xff] %v221
    %281 = vst [vmem:[#allocation2 + $0xd8] sm:$0xff] %v250
    %282 = vst [vmem:[#allocation2 + $0xe0] sm:$0xff] %v165
    %283 = vst [vmem:[#allocation2 + $0xe8] sm:$0xff] %v194
    %284 = vst [vmem:[#allocation2 + $0xf0] sm:$0xff] %v223
    %285 = vst [vmem:[#allocation2 + $0xf8] sm:$0xff] %v252
    %v286 = vld [vmem:[#allocation5] sm:$0xff]
    %v287 = vld [vmem:[#allocation5 + $0x8] sm:$0xff]
    %v288 = vld [vmem:[#allocation5 + $0x10] sm:$0xff]
    %v289 = vld [vmem:[#allocation5 + $0x18] sm:$0xff]
    %v290 = vld [vmem:[#allocation5 + $0x20] sm:$0xff]
    %v291 = vld [vmem:[#allocation5 + $0x28] sm:$0xff]
    %v292 = vld [vmem:[#allocation5 + $0x30] sm:$0xff]
    %v293 = vld [vmem:[#allocation5 + $0x38] sm:$0xff]
    %v294 = vld [vmem:[#allocation5 + $0x40] sm:$0xff]
    %v295 = vld [vmem:[#allocation5 + $0x48] sm:$0xff]
    %v296 = vld [vmem:[#allocation5 + $0x50] sm:$0xff]
    %v297 = vld [vmem:[#allocation5 + $0x58] sm:$0xff]
    %v298 = vld [vmem:[#allocation5 + $0x60] sm:$0xff]
    %v299 = vld [vmem:[#allocation5 + $0x68] sm:$0xff]
    %v300 = vld [vmem:[#allocation5 + $0x70] sm:$0xff]
    %v301 = vld [vmem:[#allocation5 + $0x78] sm:$0xff]
    %v302 = vld [vmem:[#allocation5 + $0x80] sm:$0xff]
    %v303 = vld [vmem:[#allocation5 + $0x88] sm:$0xff]
    %v304 = vld [vmem:[#allocation5 + $0x90] sm:$0xff]
    %v305 = vld [vmem:[#allocation5 + $0x98] sm:$0xff]
    %v306 = vld [vmem:[#allocation5 + $0xa0] sm:$0xff]
    %v307 = vld [vmem:[#allocation5 + $0xa8] sm:$0xff]
    %v308 = vld [vmem:[#allocation5 + $0xb0] sm:$0xff]
    %v309 = vld [vmem:[#allocation5 + $0xb8] sm:$0xff]
    %v310 = vld [vmem:[#allocation5 + $0xc0] sm:$0xff]
    %v311 = vld [vmem:[#allocation5 + $0xc8] sm:$0xff]
    %v312 = vld [vmem:[#allocation5 + $0xd0] sm:$0xff]
    %v313 = vld [vmem:[#allocation5 + $0xd8] sm:$0xff]
    %v314 = vld [vmem:[#allocation5 + $0xe0] sm:$0xff]
    %v315 = vld [vmem:[#allocation5 + $0xe8] sm:$0xff]
    %v316 = vld [vmem:[#allocation5 + $0xf0] sm:$0xff]
    %v317 = vld [vmem:[#allocation5 + $0xf8] sm:$0xff]
    %s318 = smul.u32 0, 8
    %s319 = smul.u32 0, 4
    %s320 = smul.addr %s319, 8
    %s321 = scalar_lea.vmem [#allocation2], %s320
    %v322 = vld [vmem:[%s321] sm:$0xff]
    %v323 = vld [vmem:[%s321 + $0x8] sm:$0xff]
    %v324 = vld [vmem:[%s321 + $0x10] sm:$0xff]
    %v325 = vld [vmem:[%s321 + $0x18] sm:$0xff]
    %v326 = vld [vmem:[#allocation3] sm:$0xff]
    %v327 = vpack.c.bf16 %v326, %v326
    %v360 = vunpack.c.l.b16 %v286
    %v361 = vunpack.c.h.b16 %v286
    %v362 = vunpack.c.l.b16 %v287
    %v363 = vunpack.c.h.b16 %v287
    %v364 = vunpack.c.l.b16 %v288
    %v365 = vunpack.c.h.b16 %v288
    %v366 = vunpack.c.l.b16 %v289
    %v367 = vunpack.c.h.b16 %v289
    %v368 = vunpack.c.l.b16 %v290
    %v369 = vunpack.c.h.b16 %v290
    %v370 = vunpack.c.l.b16 %v291
    %v371 = vunpack.c.h.b16 %v291
    %v372 = vunpack.c.l.b16 %v292
    %v373 = vunpack.c.h.b16 %v292
    %v374 = vunpack.c.l.b16 %v293
    %v375 = vunpack.c.h.b16 %v293
    %v376 = vunpack.c.l.b16 %v294
    %v377 = vunpack.c.h.b16 %v294
    %v378 = vunpack.c.l.b16 %v295
    %v379 = vunpack.c.h.b16 %v295
    %v380 = vunpack.c.l.b16 %v296
    %v381 = vunpack.c.h.b16 %v296
    %v382 = vunpack.c.l.b16 %v297
    %v383 = vunpack.c.h.b16 %v297
    %v384 = vunpack.c.l.b16 %v298
    %v385 = vunpack.c.h.b16 %v298
    %v386 = vunpack.c.l.b16 %v299
    %v387 = vunpack.c.h.b16 %v299
    %v388 = vunpack.c.l.b16 %v300
    %v389 = vunpack.c.h.b16 %v300
    %v390 = vunpack.c.l.b16 %v301
    %v391 = vunpack.c.h.b16 %v301
    %v392 = vunpack.c.l.b16 %v302
    %v393 = vunpack.c.h.b16 %v302
    %v394 = vunpack.c.l.b16 %v303
    %v395 = vunpack.c.h.b16 %v303
    %v396 = vunpack.c.l.b16 %v304
    %v397 = vunpack.c.h.b16 %v304
    %v398 = vunpack.c.l.b16 %v305
    %v399 = vunpack.c.h.b16 %v305
    %v400 = vunpack.c.l.b16 %v306
    %v401 = vunpack.c.h.b16 %v306
    %v402 = vunpack.c.l.b16 %v307
    %v403 = vunpack.c.h.b16 %v307
    %v404 = vunpack.c.l.b16 %v308
    %v405 = vunpack.c.h.b16 %v308
    %v406 = vunpack.c.l.b16 %v309
    %v407 = vunpack.c.h.b16 %v309
    %v408 = vunpack.c.l.b16 %v310
    %v409 = vunpack.c.h.b16 %v310
    %v410 = vunpack.c.l.b16 %v311
    %v411 = vunpack.c.h.b16 %v311
    %v412 = vunpack.c.l.b16 %v312
    %v413 = vunpack.c.h.b16 %v312
    %v414 = vunpack.c.l.b16 %v313
    %v415 = vunpack.c.h.b16 %v313
    %v416 = vunpack.c.l.b16 %v314
    %v417 = vunpack.c.h.b16 %v314
    %v418 = vunpack.c.l.b16 %v315
    %v419 = vunpack.c.h.b16 %v315
    %v420 = vunpack.c.l.b16 %v316
    %v421 = vunpack.c.h.b16 %v316
    %v422 = vunpack.c.l.b16 %v317
    %v423 = vunpack.c.h.b16 %v317
    %v424 = vpack.c.b16 %v364, %v360
    %v425 = vpack.c.b16 %v365, %v361
    %v426 = vpack.c.b16 %v366, %v362
    %v427 = vpack.c.b16 %v367, %v363
    %v428 = vpack.c.b16 %v372, %v368
    %v429 = vpack.c.b16 %v373, %v369
    %v430 = vpack.c.b16 %v374, %v370
    %v431 = vpack.c.b16 %v375, %v371
    %v432 = vpack.c.b16 %v380, %v376
    %v433 = vpack.c.b16 %v381, %v377
    %v434 = vpack.c.b16 %v382, %v378
    %v435 = vpack.c.b16 %v383, %v379
    %v436 = vpack.c.b16 %v388, %v384
    %v437 = vpack.c.b16 %v389, %v385
    %v438 = vpack.c.b16 %v390, %v386
    %v439 = vpack.c.b16 %v391, %v387
    %v440 = vpack.c.b16 %v396, %v392
    %v441 = vpack.c.b16 %v397, %v393
    %v442 = vpack.c.b16 %v398, %v394
    %v443 = vpack.c.b16 %v399, %v395
    %v444 = vpack.c.b16 %v404, %v400
    %v445 = vpack.c.b16 %v405, %v401
    %v446 = vpack.c.b16 %v406, %v402
    %v447 = vpack.c.b16 %v407, %v403
    %v448 = vpack.c.b16 %v412, %v408
    %v449 = vpack.c.b16 %v413, %v409
    %v450 = vpack.c.b16 %v414, %v410
    %v451 = vpack.c.b16 %v415, %v411
    %v452 = vpack.c.b16 %v420, %v416
    %v453 = vpack.c.b16 %v421, %v417
    %v454 = vpack.c.b16 %v422, %v418
    %v455 = vpack.c.b16 %v423, %v419
    %488 = vmatpush.bf16.msra.mxu0 %v452
    %489 = vmatpush.bf16.msra.mxu0 %v448
    %490 = vmatpush.bf16.msra.mxu0 %v444
    %491 = vmatpush.bf16.msra.mxu0 %v440
    %492 = vmatpush.bf16.msra.mxu0 %v436
    %493 = vmatpush.bf16.msra.mxu0 %v432
    %494 = vmatpush.bf16.msra.mxu0 %v428
    %495 = vmatpush.bf16.msra.mxu0 %v424
    %496 = vmatmul.bf16.gmra.mxu0 %v327
    %v497 = vpop.f32.mrf.mxu0
    %v498 = vadd.f32 0.0, %v497
    %v499 = vpop.f32.mrf.mxu0
    %500 = vdwg.mxu0
    %501 = vmatpush.bf16.msra.mxu0 %v453
    %502 = vmatpush.bf16.msra.mxu0 %v449
    %503 = vmatpush.bf16.msra.mxu0 %v445
    %504 = vmatpush.bf16.msra.mxu0 %v441
    %505 = vmatpush.bf16.msra.mxu0 %v437
    %506 = vmatpush.bf16.msra.mxu0 %v433
    %507 = vmatpush.bf16.msra.mxu0 %v429
    %508 = vmatpush.bf16.msra.mxu0 %v425
    %509 = vmatmul.bf16.gmra.mxu0 %v327
    %v510 = vpop.f32.mrf.mxu0
    %v511 = vadd.f32 0.0, %v510
    %v512 = vpop.f32.mrf.mxu0
    %513 = vdwg.mxu0
    %514 = vmatpush.bf16.msra.mxu0 %v454
    %515 = vmatpush.bf16.msra.mxu0 %v450
    %516 = vmatpush.bf16.msra.mxu0 %v446
    %517 = vmatpush.bf16.msra.mxu0 %v442
    %518 = vmatpush.bf16.msra.mxu0 %v438
    %519 = vmatpush.bf16.msra.mxu0 %v434
    %520 = vmatpush.bf16.msra.mxu0 %v430
    %521 = vmatpush.bf16.msra.mxu0 %v426
    %522 = vmatmul.bf16.gmra.mxu0 %v327
    %v523 = vpop.f32.mrf.mxu0
    %v524 = vadd.f32 0.0, %v523
    %v525 = vpop.f32.mrf.mxu0
    %526 = vdwg.mxu0
    %527 = vmatpush.bf16.msra.mxu0 %v455
    %528 = vmatpush.bf16.msra.mxu0 %v451
    %529 = vmatpush.bf16.msra.mxu0 %v447
    %530 = vmatpush.bf16.msra.mxu0 %v443
    %531 = vmatpush.bf16.msra.mxu0 %v439
    %532 = vmatpush.bf16.msra.mxu0 %v435
    %533 = vmatpush.bf16.msra.mxu0 %v431
    %534 = vmatpush.bf16.msra.mxu0 %v427
    %535 = vmatmul.bf16.gmra.mxu0 %v327
    %v536 = vpop.f32.mrf.mxu0
    %v537 = vadd.f32 0.0, %v536
    %v538 = vpop.f32.mrf.mxu0
    %539 = vdwg.mxu0
    %v540 = vadd.f32 %v322, %v498
    %v541 = vadd.f32 %v323, %v511
    %v542 = vadd.f32 %v324, %v524
    %v543 = vadd.f32 %v325, %v537
    %v544 = vxor.u32 %v540, 2147483648
    %v545 = vmul.f32 %v544, 1.442695
    %v546 = vpow.pop %v545
    %v547 = vadd.f32 %v546, 1.0
    %v548 = vrcp.pop %v547
    %v549 = vmul.f32 %v547, %v548
    %v550 = vsub.f32 1.0, %v549
    %v551 = vmul.f32 %v548, %v550
    %v552 = vadd.f32 %v548, %v551
    %vm553 = vweird.f32 %v547
    %vm554 = vweird.f32 %v548
    %vm555 = vmor %vm553, %vm554
    %v556 = vsel %vm555, %v548, %v552
    %v557 = vand.u32 2147483647, %v547
    %vm558 = vcmp.eq.f32.partialorder %v557, 8.507059e+37
    %v559 = vand.u32 %v547, 2147483648
    %v560 = vor.u32 1.1754944e-38, %v559
    %v561 = vsel %vm558, %v560, %v556
    %v562 = vmul.f32 1.0, %v561
    %v563 = vxor.u32 %v541, 2147483648
    %v564 = vmul.f32 %v563, 1.442695
    %v565 = vpow.pop %v564
    %v566 = vadd.f32 %v565, 1.0
    %v567 = vrcp.pop %v566
    %v568 = vmul.f32 %v566, %v567
    %v569 = vsub.f32 1.0, %v568
    %v570 = vmul.f32 %v567, %v569
    %v571 = vadd.f32 %v567, %v570
    %vm572 = vweird.f32 %v566
    %vm573 = vweird.f32 %v567
    %vm574 = vmor %vm572, %vm573
    %v575 = vsel %vm574, %v567, %v571
    %v576 = vand.u32 2147483647, %v566
    %vm577 = vcmp.eq.f32.partialorder %v576, 8.507059e+37
    %v578 = vand.u32 %v566, 2147483648
    %v579 = vor.u32 1.1754944e-38, %v578
    %v580 = vsel %vm577, %v579, %v575
    %v581 = vmul.f32 1.0, %v580
    %v582 = vtanh.pop %v542
    %v583 = vxor.u32 %v543, 2147483648
    %v584 = vmul.f32 %v583, 1.442695
    %v585 = vpow.pop %v584
    %v586 = vadd.f32 %v585, 1.0
    %v587 = vrcp.pop %v586
    %v588 = vmul.f32 %v586, %v587
    %v589 = vsub.f32 1.0, %v588
    %v590 = vmul.f32 %v587, %v589
    %v591 = vadd.f32 %v587, %v590
    %vm592 = vweird.f32 %v586
    %vm593 = vweird.f32 %v587
    %vm594 = vmor %vm592, %vm593
    %v595 = vsel %vm594, %v587, %v591
    %v596 = vand.u32 2147483647, %v586
    %vm597 = vcmp.eq.f32.partialorder %v596, 8.507059e+37
    %v598 = vand.u32 %v586, 2147483648
    %v599 = vor.u32 1.1754944e-38, %v598
    %v600 = vsel %vm597, %v599, %v595
    %v601 = vmul.f32 1.0, %v600
    %v602 = vld [vmem:[#allocation4] sm:$0xff]
    %v603 = vmul.f32 %v581, %v602
    %v604 = vmul.f32 %v562, %v582
    %v605 = vadd.f32 %v603, %v604
    %v606 = vtanh.pop %v605
    %v607 = vmul.f32 %v601, %v606
    %p608 = scmp.lt.s32.totalorder %s318, 8
    %s609 = scalar_select %p608, 1, 0
    %v610 = vstv %s609
    %vm611 = vcmp.eq.s32.totalorder %v610, 1
    %v612 = vsel %vm611, %v605, %v602
    %613 = vst [vmem:[#allocation4] sm:$0xff] %v612
    %v614 = vld [vmem:[#allocation3] sm:$0xff]
    %v615 = vsel %vm611, %v607, %v614
    %616 = vst [vmem:[#allocation3] sm:$0xff] %v615
    %s617 = sadd.s32 %s318, 1
    %s618 = smul.u32 1, 4
    %s619 = smul.addr %s618, 8
    %s620 = scalar_lea.vmem [#allocation2], %s619
    %v621 = vld [vmem:[%s620] sm:$0xff]
    %v622 = vld [vmem:[%s620 + $0x8] sm:$0xff]
    %v623 = vld [vmem:[%s620 + $0x10] sm:$0xff]
    %v624 = vld [vmem:[%s620 + $0x18] sm:$0xff]
    %v625 = vld [vmem:[#allocation3] sm:$0xff]
    %v626 = vpack.c.bf16 %v625, %v625
    %627 = vmatpush.bf16.msra.mxu0 %v452
    %628 = vmatpush.bf16.msra.mxu0 %v448
    %629 = vmatpush.bf16.msra.mxu0 %v444
    %630 = vmatpush.bf16.msra.mxu0 %v440
    %631 = vmatpush.bf16.msra.mxu0 %v436
    %632 = vmatpush.bf16.msra.mxu0 %v432
    %633 = vmatpush.bf16.msra.mxu0 %v428
    %634 = vmatpush.bf16.msra.mxu0 %v424
    %635 = vmatmul.bf16.gmra.mxu0 %v626
    %v636 = vpop.f32.mrf.mxu0
    %v637 = vadd.f32 0.0, %v636
    %v638 = vpop.f32.mrf.mxu0
    %639 = vdwg.mxu0
    %640 = vmatpush.bf16.msra.mxu0 %v453
    %641 = vmatpush.bf16.msra.mxu0 %v449
    %642 = vmatpush.bf16.msra.mxu0 %v445
    %643 = vmatpush.bf16.msra.mxu0 %v441
    %644 = vmatpush.bf16.msra.mxu0 %v437
    %645 = vmatpush.bf16.msra.mxu0 %v433
    %646 = vmatpush.bf16.msra.mxu0 %v429
    %647 = vmatpush.bf16.msra.mxu0 %v425
    %648 = vmatmul.bf16.gmra.mxu0 %v626
    %v649 = vpop.f32.mrf.mxu0
    %v650 = vadd.f32 0.0, %v649
    %v651 = vpop.f32.mrf.mxu0
    %652 = vdwg.mxu0
    %653 = vmatpush.bf16.msra.mxu0 %v454
    %654 = vmatpush.bf16.msra.mxu0 %v450
    %655 = vmatpush.bf16.msra.mxu0 %v446
    %656 = vmatpush.bf16.msra.mxu0 %v442
    %657 = vmatpush.bf16.msra.mxu0 %v438
    %658 = vmatpush.bf16.msra.mxu0 %v434
    %659 = vmatpush.bf16.msra.mxu0 %v430
    %660 = vmatpush.bf16.msra.mxu0 %v426
    %661 = vmatmul.bf16.gmra.mxu0 %v626
    %v662 = vpop.f32.mrf.mxu0
    %v663 = vadd.f32 0.0, %v662
    %v664 = vpop.f32.mrf.mxu0
    %665 = vdwg.mxu0
    %666 = vmatpush.bf16.msra.mxu0 %v455
    %667 = vmatpush.bf16.msra.mxu0 %v451
    %668 = vmatpush.bf16.msra.mxu0 %v447
    %669 = vmatpush.bf16.msra.mxu0 %v443
    %670 = vmatpush.bf16.msra.mxu0 %v439
    %671 = vmatpush.bf16.msra.mxu0 %v435
    %672 = vmatpush.bf16.msra.mxu0 %v431
    %673 = vmatpush.bf16.msra.mxu0 %v427
    %674 = vmatmul.bf16.gmra.mxu0 %v626
    %v675 = vpop.f32.mrf.mxu0
    %v676 = vadd.f32 0.0, %v675
    %v677 = vpop.f32.mrf.mxu0
    %678 = vdwg.mxu0
    %v679 = vadd.f32 %v621, %v637
    %v680 = vadd.f32 %v622, %v650
    %v681 = vadd.f32 %v623, %v663
    %v682 = vadd.f32 %v624, %v676
    %v683 = vxor.u32 %v679, 2147483648
    %v684 = vmul.f32 %v683, 1.442695
    %v685 = vpow.pop %v684
    %v686 = vadd.f32 %v685, 1.0
    %v687 = vrcp.pop %v686
    %v688 = vmul.f32 %v686, %v687
    %v689 = vsub.f32 1.0, %v688
    %v690 = vmul.f32 %v687, %v689
    %v691 = vadd.f32 %v687, %v690
    %vm692 = vweird.f32 %v686
    %vm693 = vweird.f32 %v687
    %vm694 = vmor %vm692, %vm693
    %v695 = vsel %vm694, %v687, %v691
    %v696 = vand.u32 2147483647, %v686
    %vm697 = vcmp.eq.f32.partialorder %v696, 8.507059e+37
    %v698 = vand.u32 %v686, 2147483648
    %v699 = vor.u32 1.1754944e-38, %v698
    %v700 = vsel %vm697, %v699, %v695
    %v701 = vmul.f32 1.0, %v700
    %v702 = vxor.u32 %v680, 2147483648
    %v703 = vmul.f32 %v702, 1.442695
    %v704 = vpow.pop %v703
    %v705 = vadd.f32 %v704, 1.0
    %v706 = vrcp.pop %v705
    %v707 = vmul.f32 %v705, %v706
    %v708 = vsub.f32 1.0, %v707
    %v709 = vmul.f32 %v706, %v708
    %v710 = vadd.f32 %v706, %v709
    %vm711 = vweird.f32 %v705
    %vm712 = vweird.f32 %v706
    %vm713 = vmor %vm711, %vm712
    %v714 = vsel %vm713, %v706, %v710
    %v715 = vand.u32 2147483647, %v705
    %vm716 = vcmp.eq.f32.partialorder %v715, 8.507059e+37
    %v717 = vand.u32 %v705, 2147483648
    %v718 = vor.u32 1.1754944e-38, %v717
    %v719 = vsel %vm716, %v718, %v714
    %v720 = vmul.f32 1.0, %v719
    %v721 = vtanh.pop %v681
    %v722 = vxor.u32 %v682, 2147483648
    %v723 = vmul.f32 %v722, 1.442695
    %v724 = vpow.pop %v723
    %v725 = vadd.f32 %v724, 1.0
    %v726 = vrcp.pop %v725
    %v727 = vmul.f32 %v725, %v726
    %v728 = vsub.f32 1.0, %v727
    %v729 = vmul.f32 %v726, %v728
    %v730 = vadd.f32 %v726, %v729
    %vm731 = vweird.f32 %v725
    %vm732 = vweird.f32 %v726
    %vm733 = vmor %vm731, %vm732
    %v734 = vsel %vm733, %v726, %v730
    %v735 = vand.u32 2147483647, %v725
    %vm736 = vcmp.eq.f32.partialorder %v735, 8.507059e+37
    %v737 = vand.u32 %v725, 2147483648
    %v738 = vor.u32 1.1754944e-38, %v737
    %v739 = vsel %vm736, %v738, %v734
    %v740 = vmul.f32 1.0, %v739
    %v741 = vld [vmem:[#allocation4] sm:$0xff]
    %v742 = vmul.f32 %v720, %v741
    %v743 = vmul.f32 %v701, %v721
    %v744 = vadd.f32 %v742, %v743
    %v745 = vtanh.pop %v744
    %v746 = vmul.f32 %v740, %v745
    %p747 = scmp.lt.s32.totalorder %s617, 8
    %s748 = scalar_select %p747, 1, 0
    %v749 = vstv %s748
    %vm750 = vcmp.eq.s32.totalorder %v749, 1
    %v751 = vsel %vm750, %v744, %v741
    %752 = vst [vmem:[#allocation4] sm:$0xff] %v751
    %v753 = vld [vmem:[#allocation3] sm:$0xff]
    %v754 = vsel %vm750, %v746, %v753
    %755 = vst [vmem:[#allocation3] sm:$0xff] %v754
    %s756 = sadd.s32 %s318, 2
    %s757 = smul.u32 2, 4
    %s758 = smul.addr %s757, 8
    %s759 = scalar_lea.vmem [#allocation2], %s758
    %v760 = vld [vmem:[%s759] sm:$0xff]
    %v761 = vld [vmem:[%s759 + $0x8] sm:$0xff]
    %v762 = vld [vmem:[%s759 + $0x10] sm:$0xff]
    %v763 = vld [vmem:[%s759 + $0x18] sm:$0xff]
    %v764 = vld [vmem:[#allocation3] sm:$0xff]
    %v765 = vpack.c.bf16 %v764, %v764
    %766 = vmatpush.bf16.msra.mxu0 %v452
    %767 = vmatpush.bf16.msra.mxu0 %v448
    %768 = vmatpush.bf16.msra.mxu0 %v444
    %769 = vmatpush.bf16.msra.mxu0 %v440
    %770 = vmatpush.bf16.msra.mxu0 %v436
    %771 = vmatpush.bf16.msra.mxu0 %v432
    %772 = vmatpush.bf16.msra.mxu0 %v428
    %773 = vmatpush.bf16.msra.mxu0 %v424
    %774 = vmatmul.bf16.gmra.mxu0 %v765
    %v775 = vpop.f32.mrf.mxu0
    %v776 = vadd.f32 0.0, %v775
    %v777 = vpop.f32.mrf.mxu0
    %778 = vdwg.mxu0
    %779 = vmatpush.bf16.msra.mxu0 %v453
    %780 = vmatpush.bf16.msra.mxu0 %v449
    %781 = vmatpush.bf16.msra.mxu0 %v445
    %782 = vmatpush.bf16.msra.mxu0 %v441
    %783 = vmatpush.bf16.msra.mxu0 %v437
    %784 = vmatpush.bf16.msra.mxu0 %v433
    %785 = vmatpush.bf16.msra.mxu0 %v429
    %786 = vmatpush.bf16.msra.mxu0 %v425
    %787 = vmatmul.bf16.gmra.mxu0 %v765
    %v788 = vpop.f32.mrf.mxu0
    %v789 = vadd.f32 0.0, %v788
    %v790 = vpop.f32.mrf.mxu0
    %791 = vdwg.mxu0
    %792 = vmatpush.bf16.msra.mxu0 %v454
    %793 = vmatpush.bf16.msra.mxu0 %v450
    %794 = vmatpush.bf16.msra.mxu0 %v446
    %795 = vmatpush.bf16.msra.mxu0 %v442
    %796 = vmatpush.bf16.msra.mxu0 %v438
    %797 = vmatpush.bf16.msra.mxu0 %v434
    %798 = vmatpush.bf16.msra.mxu0 %v430
    %799 = vmatpush.bf16.msra.mxu0 %v426
    %800 = vmatmul.bf16.gmra.mxu0 %v765
    %v801 = vpop.f32.mrf.mxu0
    %v802 = vadd.f32 0.0, %v801
    %v803 = vpop.f32.mrf.mxu0
    %804 = vdwg.mxu0
    %805 = vmatpush.bf16.msra.mxu0 %v455
    %806 = vmatpush.bf16.msra.mxu0 %v451
    %807 = vmatpush.bf16.msra.mxu0 %v447
    %808 = vmatpush.bf16.msra.mxu0 %v443
    %809 = vmatpush.bf16.msra.mxu0 %v439
    %810 = vmatpush.bf16.msra.mxu0 %v435
    %811 = vmatpush.bf16.msra.mxu0 %v431
    %812 = vmatpush.bf16.msra.mxu0 %v427
    %813 = vmatmul.bf16.gmra.mxu0 %v765
    %v814 = vpop.f32.mrf.mxu0
    %v815 = vadd.f32 0.0, %v814
    %v816 = vpop.f32.mrf.mxu0
    %817 = vdwg.mxu0
    %v818 = vadd.f32 %v760, %v776
    %v819 = vadd.f32 %v761, %v789
    %v820 = vadd.f32 %v762, %v802
    %v821 = vadd.f32 %v763, %v815
    %v822 = vxor.u32 %v818, 2147483648
    %v823 = vmul.f32 %v822, 1.442695
    %v824 = vpow.pop %v823
    %v825 = vadd.f32 %v824, 1.0
    %v826 = vrcp.pop %v825
    %v827 = vmul.f32 %v825, %v826
    %v828 = vsub.f32 1.0, %v827
    %v829 = vmul.f32 %v826, %v828
    %v830 = vadd.f32 %v826, %v829
    %vm831 = vweird.f32 %v825
    %vm832 = vweird.f32 %v826
    %vm833 = vmor %vm831, %vm832
    %v834 = vsel %vm833, %v826, %v830
    %v835 = vand.u32 2147483647, %v825
    %vm836 = vcmp.eq.f32.partialorder %v835, 8.507059e+37
    %v837 = vand.u32 %v825, 2147483648
    %v838 = vor.u32 1.1754944e-38, %v837
    %v839 = vsel %vm836, %v838, %v834
    %v840 = vmul.f32 1.0, %v839
    %v841 = vxor.u32 %v819, 2147483648
    %v842 = vmul.f32 %v841, 1.442695
    %v843 = vpow.pop %v842
    %v844 = vadd.f32 %v843, 1.0
    %v845 = vrcp.pop %v844
    %v846 = vmul.f32 %v844, %v845
    %v847 = vsub.f32 1.0, %v846
    %v848 = vmul.f32 %v845, %v847
    %v849 = vadd.f32 %v845, %v848
    %vm850 = vweird.f32 %v844
    %vm851 = vweird.f32 %v845
    %vm852 = vmor %vm850, %vm851
    %v853 = vsel %vm852, %v845, %v849
    %v854 = vand.u32 2147483647, %v844
    %vm855 = vcmp.eq.f32.partialorder %v854, 8.507059e+37
    %v856 = vand.u32 %v844, 2147483648
    %v857 = vor.u32 1.1754944e-38, %v856
    %v858 = vsel %vm855, %v857, %v853
    %v859 = vmul.f32 1.0, %v858
    %v860 = vtanh.pop %v820
    %v861 = vxor.u32 %v821, 2147483648
    %v862 = vmul.f32 %v861, 1.442695
    %v863 = vpow.pop %v862
    %v864 = vadd.f32 %v863, 1.0
    %v865 = vrcp.pop %v864
    %v866 = vmul.f32 %v864, %v865
    %v867 = vsub.f32 1.0, %v866
    %v868 = vmul.f32 %v865, %v867
    %v869 = vadd.f32 %v865, %v868
    %vm870 = vweird.f32 %v864
    %vm871 = vweird.f32 %v865
    %vm872 = vmor %vm870, %vm871
    %v873 = vsel %vm872, %v865, %v869
    %v874 = vand.u32 2147483647, %v864
    %vm875 = vcmp.eq.f32.partialorder %v874, 8.507059e+37
    %v876 = vand.u32 %v864, 2147483648
    %v877 = vor.u32 1.1754944e-38, %v876
    %v878 = vsel %vm875, %v877, %v873
    %v879 = vmul.f32 1.0, %v878
    %v880 = vld [vmem:[#allocation4] sm:$0xff]
    %v881 = vmul.f32 %v859, %v880
    %v882 = vmul.f32 %v840, %v860
    %v883 = vadd.f32 %v881, %v882
    %v884 = vtanh.pop %v883
    %v885 = vmul.f32 %v879, %v884
    %p886 = scmp.lt.s32.totalorder %s756, 8
    %s887 = scalar_select %p886, 1, 0
    %v888 = vstv %s887
    %vm889 = vcmp.eq.s32.totalorder %v888, 1
    %v890 = vsel %vm889, %v883, %v880
    %891 = vst [vmem:[#allocation4] sm:$0xff] %v890
    %v892 = vld [vmem:[#allocation3] sm:$0xff]
    %v893 = vsel %vm889, %v885, %v892
    %894 = vst [vmem:[#allocation3] sm:$0xff] %v893
    %s895 = sadd.s32 %s318, 3
    %s896 = smul.u32 3, 4
    %s897 = smul.addr %s896, 8
    %s898 = scalar_lea.vmem [#allocation2], %s897
    %v899 = vld [vmem:[%s898] sm:$0xff]
    %v900 = vld [vmem:[%s898 + $0x8] sm:$0xff]
    %v901 = vld [vmem:[%s898 + $0x10] sm:$0xff]
    %v902 = vld [vmem:[%s898 + $0x18] sm:$0xff]
    %v903 = vld [vmem:[#allocation3] sm:$0xff]
    %v904 = vpack.c.bf16 %v903, %v903
    %905 = vmatpush.bf16.msra.mxu0 %v452
    %906 = vmatpush.bf16.msra.mxu0 %v448
    %907 = vmatpush.bf16.msra.mxu0 %v444
    %908 = vmatpush.bf16.msra.mxu0 %v440
    %909 = vmatpush.bf16.msra.mxu0 %v436
    %910 = vmatpush.bf16.msra.mxu0 %v432
    %911 = vmatpush.bf16.msra.mxu0 %v428
    %912 = vmatpush.bf16.msra.mxu0 %v424
    %913 = vmatmul.bf16.gmra.mxu0 %v904
    %v914 = vpop.f32.mrf.mxu0
    %v915 = vadd.f32 0.0, %v914
    %v916 = vpop.f32.mrf.mxu0
    %917 = vdwg.mxu0
    %918 = vmatpush.bf16.msra.mxu0 %v453
    %919 = vmatpush.bf16.msra.mxu0 %v449
    %920 = vmatpush.bf16.msra.mxu0 %v445
    %921 = vmatpush.bf16.msra.mxu0 %v441
    %922 = vmatpush.bf16.msra.mxu0 %v437
    %923 = vmatpush.bf16.msra.mxu0 %v433
    %924 = vmatpush.bf16.msra.mxu0 %v429
    %925 = vmatpush.bf16.msra.mxu0 %v425
    %926 = vmatmul.bf16.gmra.mxu0 %v904
    %v927 = vpop.f32.mrf.mxu0
    %v928 = vadd.f32 0.0, %v927
    %v929 = vpop.f32.mrf.mxu0
    %930 = vdwg.mxu0
    %931 = vmatpush.bf16.msra.mxu0 %v454
    %932 = vmatpush.bf16.msra.mxu0 %v450
    %933 = vmatpush.bf16.msra.mxu0 %v446
    %934 = vmatpush.bf16.msra.mxu0 %v442
    %935 = vmatpush.bf16.msra.mxu0 %v438
    %936 = vmatpush.bf16.msra.mxu0 %v434
    %937 = vmatpush.bf16.msra.mxu0 %v430
    %938 = vmatpush.bf16.msra.mxu0 %v426
    %939 = vmatmul.bf16.gmra.mxu0 %v904
    %v940 = vpop.f32.mrf.mxu0
    %v941 = vadd.f32 0.0, %v940
    %v942 = vpop.f32.mrf.mxu0
    %943 = vdwg.mxu0
    %944 = vmatpush.bf16.msra.mxu0 %v455
    %945 = vmatpush.bf16.msra.mxu0 %v451
    %946 = vmatpush.bf16.msra.mxu0 %v447
    %947 = vmatpush.bf16.msra.mxu0 %v443
    %948 = vmatpush.bf16.msra.mxu0 %v439
    %949 = vmatpush.bf16.msra.mxu0 %v435
    %950 = vmatpush.bf16.msra.mxu0 %v431
    %951 = vmatpush.bf16.msra.mxu0 %v427
    %952 = vmatmul.bf16.gmra.mxu0 %v904
    %v953 = vpop.f32.mrf.mxu0
    %v954 = vadd.f32 0.0, %v953
    %v955 = vpop.f32.mrf.mxu0
    %956 = vdwg.mxu0
    %v957 = vadd.f32 %v899, %v915
    %v958 = vadd.f32 %v900, %v928
    %v959 = vadd.f32 %v901, %v941
    %v960 = vadd.f32 %v902, %v954
    %v961 = vxor.u32 %v957, 2147483648
    %v962 = vmul.f32 %v961, 1.442695
    %v963 = vpow.pop %v962
    %v964 = vadd.f32 %v963, 1.0
    %v965 = vrcp.pop %v964
    %v966 = vmul.f32 %v964, %v965
    %v967 = vsub.f32 1.0, %v966
    %v968 = vmul.f32 %v965, %v967
    %v969 = vadd.f32 %v965, %v968
    %vm970 = vweird.f32 %v964
    %vm971 = vweird.f32 %v965
    %vm972 = vmor %vm970, %vm971
    %v973 = vsel %vm972, %v965, %v969
    %v974 = vand.u32 2147483647, %v964
    %vm975 = vcmp.eq.f32.partialorder %v974, 8.507059e+37
    %v976 = vand.u32 %v964, 2147483648
    %v977 = vor.u32 1.1754944e-38, %v976
    %v978 = vsel %vm975, %v977, %v973
    %v979 = vmul.f32 1.0, %v978
    %v980 = vxor.u32 %v958, 2147483648
    %v981 = vmul.f32 %v980, 1.442695
    %v982 = vpow.pop %v981
    %v983 = vadd.f32 %v982, 1.0
    %v984 = vrcp.pop %v983
    %v985 = vmul.f32 %v983, %v984
    %v986 = vsub.f32 1.0, %v985
    %v987 = vmul.f32 %v984, %v986
    %v988 = vadd.f32 %v984, %v987
    %vm989 = vweird.f32 %v983
    %vm990 = vweird.f32 %v984
    %vm991 = vmor %vm989, %vm990
    %v992 = vsel %vm991, %v984, %v988
    %v993 = vand.u32 2147483647, %v983
    %vm994 = vcmp.eq.f32.partialorder %v993, 8.507059e+37
    %v995 = vand.u32 %v983, 2147483648
    %v996 = vor.u32 1.1754944e-38, %v995
    %v997 = vsel %vm994, %v996, %v992
    %v998 = vmul.f32 1.0, %v997
    %v999 = vtanh.pop %v959
    %v1000 = vxor.u32 %v960, 2147483648
    %v1001 = vmul.f32 %v1000, 1.442695
    %v1002 = vpow.pop %v1001
    %v1003 = vadd.f32 %v1002, 1.0
    %v1004 = vrcp.pop %v1003
    %v1005 = vmul.f32 %v1003, %v1004
    %v1006 = vsub.f32 1.0, %v1005
    %v1007 = vmul.f32 %v1004, %v1006
    %v1008 = vadd.f32 %v1004, %v1007
    %vm1009 = vweird.f32 %v1003
    %vm1010 = vweird.f32 %v1004
    %vm1011 = vmor %vm1009, %vm1010
    %v1012 = vsel %vm1011, %v1004, %v1008
    %v1013 = vand.u32 2147483647, %v1003
    %vm1014 = vcmp.eq.f32.partialorder %v1013, 8.507059e+37
    %v1015 = vand.u32 %v1003, 2147483648
    %v1016 = vor.u32 1.1754944e-38, %v1015
    %v1017 = vsel %vm1014, %v1016, %v1012
    %v1018 = vmul.f32 1.0, %v1017
    %v1019 = vld [vmem:[#allocation4] sm:$0xff]
    %v1020 = vmul.f32 %v998, %v1019
    %v1021 = vmul.f32 %v979, %v999
    %v1022 = vadd.f32 %v1020, %v1021
    %v1023 = vtanh.pop %v1022
    %v1024 = vmul.f32 %v1018, %v1023
    %p1025 = scmp.lt.s32.totalorder %s895, 8
    %s1026 = scalar_select %p1025, 1, 0
    %v1027 = vstv %s1026
    %vm1028 = vcmp.eq.s32.totalorder %v1027, 1
    %v1029 = vsel %vm1028, %v1022, %v1019
    %1030 = vst [vmem:[#allocation4] sm:$0xff] %v1029
    %v1031 = vld [vmem:[#allocation3] sm:$0xff]
    %v1032 = vsel %vm1028, %v1024, %v1031
    %1033 = vst [vmem:[#allocation3] sm:$0xff] %v1032
    %s1034 = sadd.s32 %s318, 4
    %s1035 = smul.u32 4, 4
    %s1036 = smul.addr %s1035, 8
    %s1037 = scalar_lea.vmem [#allocation2], %s1036
    %v1038 = vld [vmem:[%s1037] sm:$0xff]
    %v1039 = vld [vmem:[%s1037 + $0x8] sm:$0xff]
    %v1040 = vld [vmem:[%s1037 + $0x10] sm:$0xff]
    %v1041 = vld [vmem:[%s1037 + $0x18] sm:$0xff]
    %v1042 = vld [vmem:[#allocation3] sm:$0xff]
    %v1043 = vpack.c.bf16 %v1042, %v1042
    %1044 = vmatpush.bf16.msra.mxu0 %v452
    %1045 = vmatpush.bf16.msra.mxu0 %v448
    %1046 = vmatpush.bf16.msra.mxu0 %v444
    %1047 = vmatpush.bf16.msra.mxu0 %v440
    %1048 = vmatpush.bf16.msra.mxu0 %v436
    %1049 = vmatpush.bf16.msra.mxu0 %v432
    %1050 = vmatpush.bf16.msra.mxu0 %v428
    %1051 = vmatpush.bf16.msra.mxu0 %v424
    %1052 = vmatmul.bf16.gmra.mxu0 %v1043
    %v1053 = vpop.f32.mrf.mxu0
    %v1054 = vadd.f32 0.0, %v1053
    %v1055 = vpop.f32.mrf.mxu0
    %1056 = vdwg.mxu0
    %1057 = vmatpush.bf16.msra.mxu0 %v453
    %1058 = vmatpush.bf16.msra.mxu0 %v449
    %1059 = vmatpush.bf16.msra.mxu0 %v445
    %1060 = vmatpush.bf16.msra.mxu0 %v441
    %1061 = vmatpush.bf16.msra.mxu0 %v437
    %1062 = vmatpush.bf16.msra.mxu0 %v433
    %1063 = vmatpush.bf16.msra.mxu0 %v429
    %1064 = vmatpush.bf16.msra.mxu0 %v425
    %1065 = vmatmul.bf16.gmra.mxu0 %v1043
    %v1066 = vpop.f32.mrf.mxu0
    %v1067 = vadd.f32 0.0, %v1066
    %v1068 = vpop.f32.mrf.mxu0
    %1069 = vdwg.mxu0
    %1070 = vmatpush.bf16.msra.mxu0 %v454
    %1071 = vmatpush.bf16.msra.mxu0 %v450
    %1072 = vmatpush.bf16.msra.mxu0 %v446
    %1073 = vmatpush.bf16.msra.mxu0 %v442
    %1074 = vmatpush.bf16.msra.mxu0 %v438
    %1075 = vmatpush.bf16.msra.mxu0 %v434
    %1076 = vmatpush.bf16.msra.mxu0 %v430
    %1077 = vmatpush.bf16.msra.mxu0 %v426
    %1078 = vmatmul.bf16.gmra.mxu0 %v1043
    %v1079 = vpop.f32.mrf.mxu0
    %v1080 = vadd.f32 0.0, %v1079
    %v1081 = vpop.f32.mrf.mxu0
    %1082 = vdwg.mxu0
    %1083 = vmatpush.bf16.msra.mxu0 %v455
    %1084 = vmatpush.bf16.msra.mxu0 %v451
    %1085 = vmatpush.bf16.msra.mxu0 %v447
    %1086 = vmatpush.bf16.msra.mxu0 %v443
    %1087 = vmatpush.bf16.msra.mxu0 %v439
    %1088 = vmatpush.bf16.msra.mxu0 %v435
    %1089 = vmatpush.bf16.msra.mxu0 %v431
    %1090 = vmatpush.bf16.msra.mxu0 %v427
    %1091 = vmatmul.bf16.gmra.mxu0 %v1043
    %v1092 = vpop.f32.mrf.mxu0
    %v1093 = vadd.f32 0.0, %v1092
    %v1094 = vpop.f32.mrf.mxu0
    %1095 = vdwg.mxu0
    %v1096 = vadd.f32 %v1038, %v1054
    %v1097 = vadd.f32 %v1039, %v1067
    %v1098 = vadd.f32 %v1040, %v1080
    %v1099 = vadd.f32 %v1041, %v1093
    %v1100 = vxor.u32 %v1096, 2147483648
    %v1101 = vmul.f32 %v1100, 1.442695
    %v1102 = vpow.pop %v1101
    %v1103 = vadd.f32 %v1102, 1.0
    %v1104 = vrcp.pop %v1103
    %v1105 = vmul.f32 %v1103, %v1104
    %v1106 = vsub.f32 1.0, %v1105
    %v1107 = vmul.f32 %v1104, %v1106
    %v1108 = vadd.f32 %v1104, %v1107
    %vm1109 = vweird.f32 %v1103
    %vm1110 = vweird.f32 %v1104
    %vm1111 = vmor %vm1109, %vm1110
    %v1112 = vsel %vm1111, %v1104, %v1108
    %v1113 = vand.u32 2147483647, %v1103
    %vm1114 = vcmp.eq.f32.partialorder %v1113, 8.507059e+37
    %v1115 = vand.u32 %v1103, 2147483648
    %v1116 = vor.u32 1.1754944e-38, %v1115
    %v1117 = vsel %vm1114, %v1116, %v1112
    %v1118 = vmul.f32 1.0, %v1117
    %v1119 = vxor.u32 %v1097, 2147483648
    %v1120 = vmul.f32 %v1119, 1.442695
    %v1121 = vpow.pop %v1120
    %v1122 = vadd.f32 %v1121, 1.0
    %v1123 = vrcp.pop %v1122
    %v1124 = vmul.f32 %v1122, %v1123
    %v1125 = vsub.f32 1.0, %v1124
    %v1126 = vmul.f32 %v1123, %v1125
    %v1127 = vadd.f32 %v1123, %v1126
    %vm1128 = vweird.f32 %v1122
    %vm1129 = vweird.f32 %v1123
    %vm1130 = vmor %vm1128, %vm1129
    %v1131 = vsel %vm1130, %v1123, %v1127
    %v1132 = vand.u32 2147483647, %v1122
    %vm1133 = vcmp.eq.f32.partialorder %v1132, 8.507059e+37
    %v1134 = vand.u32 %v1122, 2147483648
    %v1135 = vor.u32 1.1754944e-38, %v1134
    %v1136 = vsel %vm1133, %v1135, %v1131
    %v1137 = vmul.f32 1.0, %v1136
    %v1138 = vtanh.pop %v1098
    %v1139 = vxor.u32 %v1099, 2147483648
    %v1140 = vmul.f32 %v1139, 1.442695
    %v1141 = vpow.pop %v1140
    %v1142 = vadd.f32 %v1141, 1.0
    %v1143 = vrcp.pop %v1142
    %v1144 = vmul.f32 %v1142, %v1143
    %v1145 = vsub.f32 1.0, %v1144
    %v1146 = vmul.f32 %v1143, %v1145
    %v1147 = vadd.f32 %v1143, %v1146
    %vm1148 = vweird.f32 %v1142
    %vm1149 = vweird.f32 %v1143
    %vm1150 = vmor %vm1148, %vm1149
    %v1151 = vsel %vm1150, %v1143, %v1147
    %v1152 = vand.u32 2147483647, %v1142
    %vm1153 = vcmp.eq.f32.partialorder %v1152, 8.507059e+37
    %v1154 = vand.u32 %v1142, 2147483648
    %v1155 = vor.u32 1.1754944e-38, %v1154
    %v1156 = vsel %vm1153, %v1155, %v1151
    %v1157 = vmul.f32 1.0, %v1156
    %v1158 = vld [vmem:[#allocation4] sm:$0xff]
    %v1159 = vmul.f32 %v1137, %v1158
    %v1160 = vmul.f32 %v1118, %v1138
    %v1161 = vadd.f32 %v1159, %v1160
    %v1162 = vtanh.pop %v1161
    %v1163 = vmul.f32 %v1157, %v1162
    %p1164 = scmp.lt.s32.totalorder %s1034, 8
    %s1165 = scalar_select %p1164, 1, 0
    %v1166 = vstv %s1165
    %vm1167 = vcmp.eq.s32.totalorder %v1166, 1
    %v1168 = vsel %vm1167, %v1161, %v1158
    %1169 = vst [vmem:[#allocation4] sm:$0xff] %v1168
    %v1170 = vld [vmem:[#allocation3] sm:$0xff]
    %v1171 = vsel %vm1167, %v1163, %v1170
    %1172 = vst [vmem:[#allocation3] sm:$0xff] %v1171
    %s1173 = sadd.s32 %s318, 5
    %s1174 = smul.u32 5, 4
    %s1175 = smul.addr %s1174, 8
    %s1176 = scalar_lea.vmem [#allocation2], %s1175
    %v1177 = vld [vmem:[%s1176] sm:$0xff]
    %v1178 = vld [vmem:[%s1176 + $0x8] sm:$0xff]
    %v1179 = vld [vmem:[%s1176 + $0x10] sm:$0xff]
    %v1180 = vld [vmem:[%s1176 + $0x18] sm:$0xff]
    %v1181 = vld [vmem:[#allocation3] sm:$0xff]
    %v1182 = vpack.c.bf16 %v1181, %v1181
    %1183 = vmatpush.bf16.msra.mxu0 %v452
    %1184 = vmatpush.bf16.msra.mxu0 %v448
    %1185 = vmatpush.bf16.msra.mxu0 %v444
    %1186 = vmatpush.bf16.msra.mxu0 %v440
    %1187 = vmatpush.bf16.msra.mxu0 %v436
    %1188 = vmatpush.bf16.msra.mxu0 %v432
    %1189 = vmatpush.bf16.msra.mxu0 %v428
    %1190 = vmatpush.bf16.msra.mxu0 %v424
    %1191 = vmatmul.bf16.gmra.mxu0 %v1182
    %v1192 = vpop.f32.mrf.mxu0
    %v1193 = vadd.f32 0.0, %v1192
    %v1194 = vpop.f32.mrf.mxu0
    %1195 = vdwg.mxu0
    %1196 = vmatpush.bf16.msra.mxu0 %v453
    %1197 = vmatpush.bf16.msra.mxu0 %v449
    %1198 = vmatpush.bf16.msra.mxu0 %v445
    %1199 = vmatpush.bf16.msra.mxu0 %v441
    %1200 = vmatpush.bf16.msra.mxu0 %v437
    %1201 = vmatpush.bf16.msra.mxu0 %v433
    %1202 = vmatpush.bf16.msra.mxu0 %v429
    %1203 = vmatpush.bf16.msra.mxu0 %v425
    %1204 = vmatmul.bf16.gmra.mxu0 %v1182
    %v1205 = vpop.f32.mrf.mxu0
    %v1206 = vadd.f32 0.0, %v1205
    %v1207 = vpop.f32.mrf.mxu0
    %1208 = vdwg.mxu0
    %1209 = vmatpush.bf16.msra.mxu0 %v454
    %1210 = vmatpush.bf16.msra.mxu0 %v450
    %1211 = vmatpush.bf16.msra.mxu0 %v446
    %1212 = vmatpush.bf16.msra.mxu0 %v442
    %1213 = vmatpush.bf16.msra.mxu0 %v438
    %1214 = vmatpush.bf16.msra.mxu0 %v434
    %1215 = vmatpush.bf16.msra.mxu0 %v430
    %1216 = vmatpush.bf16.msra.mxu0 %v426
    %1217 = vmatmul.bf16.gmra.mxu0 %v1182
    %v1218 = vpop.f32.mrf.mxu0
    %v1219 = vadd.f32 0.0, %v1218
    %v1220 = vpop.f32.mrf.mxu0
    %1221 = vdwg.mxu0
    %1222 = vmatpush.bf16.msra.mxu0 %v455
    %1223 = vmatpush.bf16.msra.mxu0 %v451
    %1224 = vmatpush.bf16.msra.mxu0 %v447
    %1225 = vmatpush.bf16.msra.mxu0 %v443
    %1226 = vmatpush.bf16.msra.mxu0 %v439
    %1227 = vmatpush.bf16.msra.mxu0 %v435
    %1228 = vmatpush.bf16.msra.mxu0 %v431
    %1229 = vmatpush.bf16.msra.mxu0 %v427
    %1230 = vmatmul.bf16.gmra.mxu0 %v1182
    %v1231 = vpop.f32.mrf.mxu0
    %v1232 = vadd.f32 0.0, %v1231
    %v1233 = vpop.f32.mrf.mxu0
    %1234 = vdwg.mxu0
    %v1235 = vadd.f32 %v1177, %v1193
    %v1236 = vadd.f32 %v1178, %v1206
    %v1237 = vadd.f32 %v1179, %v1219
    %v1238 = vadd.f32 %v1180, %v1232
    %v1239 = vxor.u32 %v1235, 2147483648
    %v1240 = vmul.f32 %v1239, 1.442695
    %v1241 = vpow.pop %v1240
    %v1242 = vadd.f32 %v1241, 1.0
    %v1243 = vrcp.pop %v1242
    %v1244 = vmul.f32 %v1242, %v1243
    %v1245 = vsub.f32 1.0, %v1244
    %v1246 = vmul.f32 %v1243, %v1245
    %v1247 = vadd.f32 %v1243, %v1246
    %vm1248 = vweird.f32 %v1242
    %vm1249 = vweird.f32 %v1243
    %vm1250 = vmor %vm1248, %vm1249
    %v1251 = vsel %vm1250, %v1243, %v1247
    %v1252 = vand.u32 2147483647, %v1242
    %vm1253 = vcmp.eq.f32.partialorder %v1252, 8.507059e+37
    %v1254 = vand.u32 %v1242, 2147483648
    %v1255 = vor.u32 1.1754944e-38, %v1254
    %v1256 = vsel %vm1253, %v1255, %v1251
    %v1257 = vmul.f32 1.0, %v1256
    %v1258 = vxor.u32 %v1236, 2147483648
    %v1259 = vmul.f32 %v1258, 1.442695
    %v1260 = vpow.pop %v1259
    %v1261 = vadd.f32 %v1260, 1.0
    %v1262 = vrcp.pop %v1261
    %v1263 = vmul.f32 %v1261, %v1262
    %v1264 = vsub.f32 1.0, %v1263
    %v1265 = vmul.f32 %v1262, %v1264
    %v1266 = vadd.f32 %v1262, %v1265
    %vm1267 = vweird.f32 %v1261
    %vm1268 = vweird.f32 %v1262
    %vm1269 = vmor %vm1267, %vm1268
    %v1270 = vsel %vm1269, %v1262, %v1266
    %v1271 = vand.u32 2147483647, %v1261
    %vm1272 = vcmp.eq.f32.partialorder %v1271, 8.507059e+37
    %v1273 = vand.u32 %v1261, 2147483648
    %v1274 = vor.u32 1.1754944e-38, %v1273
    %v1275 = vsel %vm1272, %v1274, %v1270
    %v1276 = vmul.f32 1.0, %v1275
    %v1277 = vtanh.pop %v1237
    %v1278 = vxor.u32 %v1238, 2147483648
    %v1279 = vmul.f32 %v1278, 1.442695
    %v1280 = vpow.pop %v1279
    %v1281 = vadd.f32 %v1280, 1.0
    %v1282 = vrcp.pop %v1281
    %v1283 = vmul.f32 %v1281, %v1282
    %v1284 = vsub.f32 1.0, %v1283
    %v1285 = vmul.f32 %v1282, %v1284
    %v1286 = vadd.f32 %v1282, %v1285
    %vm1287 = vweird.f32 %v1281
    %vm1288 = vweird.f32 %v1282
    %vm1289 = vmor %vm1287, %vm1288
    %v1290 = vsel %vm1289, %v1282, %v1286
    %v1291 = vand.u32 2147483647, %v1281
    %vm1292 = vcmp.eq.f32.partialorder %v1291, 8.507059e+37
    %v1293 = vand.u32 %v1281, 2147483648
    %v1294 = vor.u32 1.1754944e-38, %v1293
    %v1295 = vsel %vm1292, %v1294, %v1290
    %v1296 = vmul.f32 1.0, %v1295
    %v1297 = vld [vmem:[#allocation4] sm:$0xff]
    %v1298 = vmul.f32 %v1276, %v1297
    %v1299 = vmul.f32 %v1257, %v1277
    %v1300 = vadd.f32 %v1298, %v1299
    %v1301 = vtanh.pop %v1300
    %v1302 = vmul.f32 %v1296, %v1301
    %p1303 = scmp.lt.s32.totalorder %s1173, 8
    %s1304 = scalar_select %p1303, 1, 0
    %v1305 = vstv %s1304
    %vm1306 = vcmp.eq.s32.totalorder %v1305, 1
    %v1307 = vsel %vm1306, %v1300, %v1297
    %1308 = vst [vmem:[#allocation4] sm:$0xff] %v1307
    %v1309 = vld [vmem:[#allocation3] sm:$0xff]
    %v1310 = vsel %vm1306, %v1302, %v1309
    %1311 = vst [vmem:[#allocation3] sm:$0xff] %v1310
    %s1312 = sadd.s32 %s318, 6
    %s1313 = smul.u32 6, 4
    %s1314 = smul.addr %s1313, 8
    %s1315 = scalar_lea.vmem [#allocation2], %s1314
    %v1316 = vld [vmem:[%s1315] sm:$0xff]
    %v1317 = vld [vmem:[%s1315 + $0x8] sm:$0xff]
    %v1318 = vld [vmem:[%s1315 + $0x10] sm:$0xff]
    %v1319 = vld [vmem:[%s1315 + $0x18] sm:$0xff]
    %v1320 = vld [vmem:[#allocation3] sm:$0xff]
    %v1321 = vpack.c.bf16 %v1320, %v1320
    %1322 = vmatpush.bf16.msra.mxu0 %v452
    %1323 = vmatpush.bf16.msra.mxu0 %v448
    %1324 = vmatpush.bf16.msra.mxu0 %v444
    %1325 = vmatpush.bf16.msra.mxu0 %v440
    %1326 = vmatpush.bf16.msra.mxu0 %v436
    %1327 = vmatpush.bf16.msra.mxu0 %v432
    %1328 = vmatpush.bf16.msra.mxu0 %v428
    %1329 = vmatpush.bf16.msra.mxu0 %v424
    %1330 = vmatmul.bf16.gmra.mxu0 %v1321
    %v1331 = vpop.f32.mrf.mxu0
    %v1332 = vadd.f32 0.0, %v1331
    %v1333 = vpop.f32.mrf.mxu0
    %1334 = vdwg.mxu0
    %1335 = vmatpush.bf16.msra.mxu0 %v453
    %1336 = vmatpush.bf16.msra.mxu0 %v449
    %1337 = vmatpush.bf16.msra.mxu0 %v445
    %1338 = vmatpush.bf16.msra.mxu0 %v441
    %1339 = vmatpush.bf16.msra.mxu0 %v437
    %1340 = vmatpush.bf16.msra.mxu0 %v433
    %1341 = vmatpush.bf16.msra.mxu0 %v429
    %1342 = vmatpush.bf16.msra.mxu0 %v425
    %1343 = vmatmul.bf16.gmra.mxu0 %v1321
    %v1344 = vpop.f32.mrf.mxu0
    %v1345 = vadd.f32 0.0, %v1344
    %v1346 = vpop.f32.mrf.mxu0
    %1347 = vdwg.mxu0
    %1348 = vmatpush.bf16.msra.mxu0 %v454
    %1349 = vmatpush.bf16.msra.mxu0 %v450
    %1350 = vmatpush.bf16.msra.mxu0 %v446
    %1351 = vmatpush.bf16.msra.mxu0 %v442
    %1352 = vmatpush.bf16.msra.mxu0 %v438
    %1353 = vmatpush.bf16.msra.mxu0 %v434
    %1354 = vmatpush.bf16.msra.mxu0 %v430
    %1355 = vmatpush.bf16.msra.mxu0 %v426
    %1356 = vmatmul.bf16.gmra.mxu0 %v1321
    %v1357 = vpop.f32.mrf.mxu0
    %v1358 = vadd.f32 0.0, %v1357
    %v1359 = vpop.f32.mrf.mxu0
    %1360 = vdwg.mxu0
    %1361 = vmatpush.bf16.msra.mxu0 %v455
    %1362 = vmatpush.bf16.msra.mxu0 %v451
    %1363 = vmatpush.bf16.msra.mxu0 %v447
    %1364 = vmatpush.bf16.msra.mxu0 %v443
    %1365 = vmatpush.bf16.msra.mxu0 %v439
    %1366 = vmatpush.bf16.msra.mxu0 %v435
    %1367 = vmatpush.bf16.msra.mxu0 %v431
    %1368 = vmatpush.bf16.msra.mxu0 %v427
    %1369 = vmatmul.bf16.gmra.mxu0 %v1321
    %v1370 = vpop.f32.mrf.mxu0
    %v1371 = vadd.f32 0.0, %v1370
    %v1372 = vpop.f32.mrf.mxu0
    %1373 = vdwg.mxu0
    %v1374 = vadd.f32 %v1316, %v1332
    %v1375 = vadd.f32 %v1317, %v1345
    %v1376 = vadd.f32 %v1318, %v1358
    %v1377 = vadd.f32 %v1319, %v1371
    %v1378 = vxor.u32 %v1374, 2147483648
    %v1379 = vmul.f32 %v1378, 1.442695
    %v1380 = vpow.pop %v1379
    %v1381 = vadd.f32 %v1380, 1.0
    %v1382 = vrcp.pop %v1381
    %v1383 = vmul.f32 %v1381, %v1382
    %v1384 = vsub.f32 1.0, %v1383
    %v1385 = vmul.f32 %v1382, %v1384
    %v1386 = vadd.f32 %v1382, %v1385
    %vm1387 = vweird.f32 %v1381
    %vm1388 = vweird.f32 %v1382
    %vm1389 = vmor %vm1387, %vm1388
    %v1390 = vsel %vm1389, %v1382, %v1386
    %v1391 = vand.u32 2147483647, %v1381
    %vm1392 = vcmp.eq.f32.partialorder %v1391, 8.507059e+37
    %v1393 = vand.u32 %v1381, 2147483648
    %v1394 = vor.u32 1.1754944e-38, %v1393
    %v1395 = vsel %vm1392, %v1394, %v1390
    %v1396 = vmul.f32 1.0, %v1395
    %v1397 = vxor.u32 %v1375, 2147483648
    %v1398 = vmul.f32 %v1397, 1.442695
    %v1399 = vpow.pop %v1398
    %v1400 = vadd.f32 %v1399, 1.0
    %v1401 = vrcp.pop %v1400
    %v1402 = vmul.f32 %v1400, %v1401
    %v1403 = vsub.f32 1.0, %v1402
    %v1404 = vmul.f32 %v1401, %v1403
    %v1405 = vadd.f32 %v1401, %v1404
    %vm1406 = vweird.f32 %v1400
    %vm1407 = vweird.f32 %v1401
    %vm1408 = vmor %vm1406, %vm1407
    %v1409 = vsel %vm1408, %v1401, %v1405
    %v1410 = vand.u32 2147483647, %v1400
    %vm1411 = vcmp.eq.f32.partialorder %v1410, 8.507059e+37
    %v1412 = vand.u32 %v1400, 2147483648
    %v1413 = vor.u32 1.1754944e-38, %v1412
    %v1414 = vsel %vm1411, %v1413, %v1409
    %v1415 = vmul.f32 1.0, %v1414
    %v1416 = vtanh.pop %v1376
    %v1417 = vxor.u32 %v1377, 2147483648
    %v1418 = vmul.f32 %v1417, 1.442695
    %v1419 = vpow.pop %v1418
    %v1420 = vadd.f32 %v1419, 1.0
    %v1421 = vrcp.pop %v1420
    %v1422 = vmul.f32 %v1420, %v1421
    %v1423 = vsub.f32 1.0, %v1422
    %v1424 = vmul.f32 %v1421, %v1423
    %v1425 = vadd.f32 %v1421, %v1424
    %vm1426 = vweird.f32 %v1420
    %vm1427 = vweird.f32 %v1421
    %vm1428 = vmor %vm1426, %vm1427
    %v1429 = vsel %vm1428, %v1421, %v1425
    %v1430 = vand.u32 2147483647, %v1420
    %vm1431 = vcmp.eq.f32.partialorder %v1430, 8.507059e+37
    %v1432 = vand.u32 %v1420, 2147483648
    %v1433 = vor.u32 1.1754944e-38, %v1432
    %v1434 = vsel %vm1431, %v1433, %v1429
    %v1435 = vmul.f32 1.0, %v1434
    %v1436 = vld [vmem:[#allocation4] sm:$0xff]
    %v1437 = vmul.f32 %v1415, %v1436
    %v1438 = vmul.f32 %v1396, %v1416
    %v1439 = vadd.f32 %v1437, %v1438
    %v1440 = vtanh.pop %v1439
    %v1441 = vmul.f32 %v1435, %v1440
    %p1442 = scmp.lt.s32.totalorder %s1312, 8
    %s1443 = scalar_select %p1442, 1, 0
    %v1444 = vstv %s1443
    %vm1445 = vcmp.eq.s32.totalorder %v1444, 1
    %v1446 = vsel %vm1445, %v1439, %v1436
    %1447 = vst [vmem:[#allocation4] sm:$0xff] %v1446
    %v1448 = vld [vmem:[#allocation3] sm:$0xff]
    %v1449 = vsel %vm1445, %v1441, %v1448
    %1450 = vst [vmem:[#allocation3] sm:$0xff] %v1449
    %s1451 = sadd.s32 %s318, 7
    %s1452 = smul.u32 7, 4
    %s1453 = smul.addr %s1452, 8
    %s1454 = scalar_lea.vmem [#allocation2], %s1453
    %v1455 = vld [vmem:[%s1454] sm:$0xff]
    %v1456 = vld [vmem:[%s1454 + $0x8] sm:$0xff]
    %v1457 = vld [vmem:[%s1454 + $0x10] sm:$0xff]
    %v1458 = vld [vmem:[%s1454 + $0x18] sm:$0xff]
    %v1459 = vld [vmem:[#allocation3] sm:$0xff]
    %v1460 = vpack.c.bf16 %v1459, %v1459
    %1461 = vmatpush.bf16.msra.mxu0 %v452
    %1462 = vmatpush.bf16.msra.mxu0 %v448
    %1463 = vmatpush.bf16.msra.mxu0 %v444
    %1464 = vmatpush.bf16.msra.mxu0 %v440
    %1465 = vmatpush.bf16.msra.mxu0 %v436
    %1466 = vmatpush.bf16.msra.mxu0 %v432
    %1467 = vmatpush.bf16.msra.mxu0 %v428
    %1468 = vmatpush.bf16.msra.mxu0 %v424
    %1469 = vmatmul.bf16.gmra.mxu0 %v1460
    %v1470 = vpop.f32.mrf.mxu0
    %v1471 = vadd.f32 0.0, %v1470
    %v1472 = vpop.f32.mrf.mxu0
    %1473 = vdwg.mxu0
    %1474 = vmatpush.bf16.msra.mxu0 %v453
    %1475 = vmatpush.bf16.msra.mxu0 %v449
    %1476 = vmatpush.bf16.msra.mxu0 %v445
    %1477 = vmatpush.bf16.msra.mxu0 %v441
    %1478 = vmatpush.bf16.msra.mxu0 %v437
    %1479 = vmatpush.bf16.msra.mxu0 %v433
    %1480 = vmatpush.bf16.msra.mxu0 %v429
    %1481 = vmatpush.bf16.msra.mxu0 %v425
    %1482 = vmatmul.bf16.gmra.mxu0 %v1460
    %v1483 = vpop.f32.mrf.mxu0
    %v1484 = vadd.f32 0.0, %v1483
    %v1485 = vpop.f32.mrf.mxu0
    %1486 = vdwg.mxu0
    %1487 = vmatpush.bf16.msra.mxu0 %v454
    %1488 = vmatpush.bf16.msra.mxu0 %v450
    %1489 = vmatpush.bf16.msra.mxu0 %v446
    %1490 = vmatpush.bf16.msra.mxu0 %v442
    %1491 = vmatpush.bf16.msra.mxu0 %v438
    %1492 = vmatpush.bf16.msra.mxu0 %v434
    %1493 = vmatpush.bf16.msra.mxu0 %v430
    %1494 = vmatpush.bf16.msra.mxu0 %v426
    %1495 = vmatmul.bf16.gmra.mxu0 %v1460
    %v1496 = vpop.f32.mrf.mxu0
    %v1497 = vadd.f32 0.0, %v1496
    %v1498 = vpop.f32.mrf.mxu0
    %1499 = vdwg.mxu0
    %1500 = vmatpush.bf16.msra.mxu0 %v455
    %1501 = vmatpush.bf16.msra.mxu0 %v451
    %1502 = vmatpush.bf16.msra.mxu0 %v447
    %1503 = vmatpush.bf16.msra.mxu0 %v443
    %1504 = vmatpush.bf16.msra.mxu0 %v439
    %1505 = vmatpush.bf16.msra.mxu0 %v435
    %1506 = vmatpush.bf16.msra.mxu0 %v431
    %1507 = vmatpush.bf16.msra.mxu0 %v427
    %1508 = vmatmul.bf16.gmra.mxu0 %v1460
    %v1509 = vpop.f32.mrf.mxu0
    %v1510 = vadd.f32 0.0, %v1509
    %v1511 = vpop.f32.mrf.mxu0
    %1512 = vdwg.mxu0
    %v1513 = vadd.f32 %v1455, %v1471
    %v1514 = vadd.f32 %v1456, %v1484
    %v1515 = vadd.f32 %v1457, %v1497
    %v1516 = vadd.f32 %v1458, %v1510
    %v1517 = vxor.u32 %v1513, 2147483648
    %v1518 = vmul.f32 %v1517, 1.442695
    %v1519 = vpow.pop %v1518
    %v1520 = vadd.f32 %v1519, 1.0
    %v1521 = vrcp.pop %v1520
    %v1522 = vmul.f32 %v1520, %v1521
    %v1523 = vsub.f32 1.0, %v1522
    %v1524 = vmul.f32 %v1521, %v1523
    %v1525 = vadd.f32 %v1521, %v1524
    %vm1526 = vweird.f32 %v1520
    %vm1527 = vweird.f32 %v1521
    %vm1528 = vmor %vm1526, %vm1527
    %v1529 = vsel %vm1528, %v1521, %v1525
    %v1530 = vand.u32 2147483647, %v1520
    %vm1531 = vcmp.eq.f32.partialorder %v1530, 8.507059e+37
    %v1532 = vand.u32 %v1520, 2147483648
    %v1533 = vor.u32 1.1754944e-38, %v1532
    %v1534 = vsel %vm1531, %v1533, %v1529
    %v1535 = vmul.f32 1.0, %v1534
    %v1536 = vxor.u32 %v1514, 2147483648
    %v1537 = vmul.f32 %v1536, 1.442695
    %v1538 = vpow.pop %v1537
    %v1539 = vadd.f32 %v1538, 1.0
    %v1540 = vrcp.pop %v1539
    %v1541 = vmul.f32 %v1539, %v1540
    %v1542 = vsub.f32 1.0, %v1541
    %v1543 = vmul.f32 %v1540, %v1542
    %v1544 = vadd.f32 %v1540, %v1543
    %vm1545 = vweird.f32 %v1539
    %vm1546 = vweird.f32 %v1540
    %vm1547 = vmor %vm1545, %vm1546
    %v1548 = vsel %vm1547, %v1540, %v1544
    %v1549 = vand.u32 2147483647, %v1539
    %vm1550 = vcmp.eq.f32.partialorder %v1549, 8.507059e+37
    %v1551 = vand.u32 %v1539, 2147483648
    %v1552 = vor.u32 1.1754944e-38, %v1551
    %v1553 = vsel %vm1550, %v1552, %v1548
    %v1554 = vmul.f32 1.0, %v1553
    %v1555 = vtanh.pop %v1515
    %v1556 = vxor.u32 %v1516, 2147483648
    %v1557 = vmul.f32 %v1556, 1.442695
    %v1558 = vpow.pop %v1557
    %v1559 = vadd.f32 %v1558, 1.0
    %v1560 = vrcp.pop %v1559
    %v1561 = vmul.f32 %v1559, %v1560
    %v1562 = vsub.f32 1.0, %v1561
    %v1563 = vmul.f32 %v1560, %v1562
    %v1564 = vadd.f32 %v1560, %v1563
    %vm1565 = vweird.f32 %v1559
    %vm1566 = vweird.f32 %v1560
    %vm1567 = vmor %vm1565, %vm1566
    %v1568 = vsel %vm1567, %v1560, %v1564
    %v1569 = vand.u32 2147483647, %v1559
    %vm1570 = vcmp.eq.f32.partialorder %v1569, 8.507059e+37
    %v1571 = vand.u32 %v1559, 2147483648
    %v1572 = vor.u32 1.1754944e-38, %v1571
    %v1573 = vsel %vm1570, %v1572, %v1568
    %v1574 = vmul.f32 1.0, %v1573
    %v1575 = vld [vmem:[#allocation4] sm:$0xff]
    %v1576 = vmul.f32 %v1554, %v1575
    %v1577 = vmul.f32 %v1535, %v1555
    %v1578 = vadd.f32 %v1576, %v1577
    %v1579 = vtanh.pop %v1578
    %v1580 = vmul.f32 %v1574, %v1579
    %p1581 = scmp.lt.s32.totalorder %s1451, 8
    %s1582 = scalar_select %p1581, 1, 0
    %v1583 = vstv %s1582
    %vm1584 = vcmp.eq.s32.totalorder %v1583, 1
    %v1585 = vsel %vm1584, %v1578, %v1575
    %1586 = vst [vmem:[#allocation4] sm:$0xff] %v1585
    %v1587 = vld [vmem:[#allocation3] sm:$0xff]
    %v1588 = vsel %vm1584, %v1580, %v1587
    %1589 = vst [vmem:[#allocation3] sm:$0xff] %v1588
    // Predicated region
    $region38: #{tpu_custom_call.1} parent=1 // pred_check
      %p1590 = pneg %p57
    $region39: #{tpu_custom_call.1} parent=1 // pred_check_branch
      %1592 = sbr.rel (%p1590) target = $region41
    $region40: #{tpu_custom_call.1} parent=1 // pred_region
      %v1593 = vld [vmem:[#allocation3] sm:$0xff]
      %v1594 = vpack.c.bf16 %v1593, %v1593
      %v1595 = vld [vmem:[#allocation8] sm:$0xf]
      %v1596 = vld [vmem:[#allocation8 + $0x4] sm:$0xf]
      %v1597 = vld [vmem:[#allocation8 + $0x8] sm:$0xf]
      %v1598 = vld [vmem:[#allocation8 + $0xc] sm:$0xf]
      %v1599 = vld [vmem:[#allocation8 + $0x10] sm:$0xf]
      %v1600 = vld [vmem:[#allocation8 + $0x14] sm:$0xf]
      %v1601 = vld [vmem:[#allocation8 + $0x18] sm:$0xf]
      %v1602 = vld [vmem:[#allocation8 + $0x1c] sm:$0xf]
      %v1603 = vld [vmem:[#allocation8 + $0x20] sm:$0xf]
      %v1604 = vld [vmem:[#allocation8 + $0x24] sm:$0xf]
      %v1605 = vld [vmem:[#allocation8 + $0x28] sm:$0xf]
      %v1606 = vld [vmem:[#allocation8 + $0x2c] sm:$0xf]
      %v1607 = vld [vmem:[#allocation8 + $0x30] sm:$0xf]
      %v1608 = vld [vmem:[#allocation8 + $0x34] sm:$0xf]
      %v1609 = vld [vmem:[#allocation8 + $0x38] sm:$0xf]
      %v1610 = vld [vmem:[#allocation8 + $0x3c] sm:$0xf]
      %v1611 = vld [vmem:[%s5] sm:$0x1]
      %v1613 = vperm.slane %v1611, 0
      %v1631 = vunpack.c.l.b16 %v1595
      %v1632 = vunpack.c.l.b16 %v1596
      %v1633 = vunpack.c.l.b16 %v1597
      %v1634 = vunpack.c.l.b16 %v1598
      %v1635 = vunpack.c.l.b16 %v1599
      %v1636 = vunpack.c.l.b16 %v1600
      %v1637 = vunpack.c.l.b16 %v1601
      %v1638 = vunpack.c.l.b16 %v1602
      %v1639 = vunpack.c.l.b16 %v1603
      %v1640 = vunpack.c.l.b16 %v1604
      %v1641 = vunpack.c.l.b16 %v1605
      %v1642 = vunpack.c.l.b16 %v1606
      %v1643 = vunpack.c.l.b16 %v1607
      %v1644 = vunpack.c.l.b16 %v1608
      %v1645 = vunpack.c.l.b16 %v1609
      %v1646 = vunpack.c.l.b16 %v1610
      %v1647 = vpack.c.b16 %v1632, %v1631
      %v1648 = vpack.c.b16 %v1634, %v1633
      %v1649 = vpack.c.b16 %v1636, %v1635
      %v1650 = vpack.c.b16 %v1638, %v1637
      %v1651 = vpack.c.b16 %v1640, %v1639
      %v1652 = vpack.c.b16 %v1642, %v1641
      %v1653 = vpack.c.b16 %v1644, %v1643
      %v1654 = vpack.c.b16 %v1646, %v1645
      %1663 = vmatpush.bf16.msra.mxu0 %v1654
      %1664 = vmatpush.bf16.msra.mxu0 %v1653
      %1665 = vmatpush.bf16.msra.mxu0 %v1652
      %1666 = vmatpush.bf16.msra.mxu0 %v1651
      %1667 = vmatpush.bf16.msra.mxu0 %v1650
      %1668 = vmatpush.bf16.msra.mxu0 %v1649
      %1669 = vmatpush.bf16.msra.mxu0 %v1648
      %1670 = vmatpush.bf16.msra.mxu0 %v1647
      %1671 = vmatmul.bf16.gmra.mxu0 %v1594
      %v1672 = vpop.f32.mrf.mxu0
      %v1673 = vadd.f32 %v1613, %v1672
      %v1674 = vpop.f32.mrf.mxu0
      %1675 = vdwg.mxu0
      %1676 = vst [vmem:[#allocation10] sm:$0xff] %v1673
    $region41: #{tpu_custom_call.1} parent=1 // pred_fallthru
      _
    // Predicated region
    $region42: #{tpu_custom_call.1} parent=1 // pred_check
      _
    $region43: #{tpu_custom_call.1} parent=1 // pred_check_branch
      %1678 = sbr.rel (0) target = $region45
    $region44: #{tpu_custom_call.1} parent=1 // pred_region
      %1680 = vsyncadd [#allocation7], 0
      %s1682 = sshll.u32 [#allocation10], 4
      %s1683 = int_to_ptr.vmem [resolvable:$true] %s1682
      %s1684 = sshll.u32 %s6, 4
      %s1685 = int_to_ptr.hbm [resolvable:$true] %s1684
      %1687 = dma.vmem_to_hbm [thread:$0]  %s1683, 128, %s1685, [#allocation7]
    $region45: #{tpu_custom_call.1} parent=1 // pred_fallthru
      _
    // Predicated region
    $region46: #{tpu_custom_call.1} parent=1 // pred_check
      _
    $region47: #{tpu_custom_call.1} parent=1 // pred_check_branch
      %1689 = sbr.rel (0) target = $region49
    $region48: #{tpu_custom_call.1} parent=1 // pred_region
      %1691 = dma.done [#allocation7], 128
    $region49: #{tpu_custom_call.1} parent=1 // pred_fallthru
      _
    %1692 = vsyncpa [#allocation6], 1
    %1693 = vsyncpa [#allocation9], 1
    %1694 = vsyncpa [#allocation7], 1

</llo_original>
